<compile_context>
chip_gen: v7x
topology: tpu7x:2x2x1
jax: 0.10.0
libtpu: 0.0.40
codegen_flags: <defaults>
</compile_context>

<pallas_src>
import jax
import jax.numpy as jnp
from jax.experimental import pallas as pl
from jax.experimental.pallas import tpu as pltpu


def _round_up(x, m):
    return (x + m - 1) // m * m


# ---------------------------------------------------------------------------
# Pallas kernels
# ---------------------------------------------------------------------------

def _conv_pool_kernel(p_ref, w_ref, b_ref, o_ref):
    """Fused conv-as-matmul + bias + relu + 2x2 maxpool.

    p_ref: (4, TM, K) im2col patches, leading axis = the 4 corners of each 2x2 pool window.
    w_ref: (K, C), b_ref: (1, C), o_ref: (TM, C) pooled output rows.
    relu(max_c(x_c @ W) + b) == maxpool(relu(conv + b)) since the bias is shared.
    """
    w = w_ref[...]
    acc = jnp.dot(p_ref[0], w, preferred_element_type=jnp.float32)
    for c in range(1, 4):
        acc = jnp.maximum(acc, jnp.dot(p_ref[c], w, preferred_element_type=jnp.float32))
    o_ref[...] = jnp.maximum(acc + b_ref[...], 0.0)


def _fc_head_kernel(x_ref, w1_ref, b1_ref, w2_ref, b2_ref, o_ref):
    """fc1 + relu + fc2 + log_softmax, fused, row-tiled over the batch."""
    h = jnp.dot(x_ref[...], w1_ref[...], preferred_element_type=jnp.float32) + b1_ref[...]
    h = jnp.maximum(h, 0.0)
    logits = jnp.dot(h, w2_ref[...], preferred_element_type=jnp.float32) + b2_ref[...]
    m = jnp.max(logits, axis=1, keepdims=True)
    lse = m + jnp.log(jnp.sum(jnp.exp(logits - m), axis=1, keepdims=True))
    o_ref[...] = logits - lse


# ---------------------------------------------------------------------------
# Pallas wrappers (row-tiled, parallel grid, explicit VMEM budget, cost estimates)
# ---------------------------------------------------------------------------

_VMEM_LIMIT = 32 * 1024 * 1024  # safe on v5e/v6e/v7x; blocks below are far smaller anyway


def conv_relu_pool(patches, w, b, *, tile_rows=1024):
    """patches: (4, M, K) corner-major im2col; returns pooled+relu'd (M, C)."""
    _, M, K = patches.shape
    C = w.shape[1]
    TM = min(tile_rows, _round_up(M, 8))          # multiple of 8 (sublane constraint)
    M_pad = _round_up(M, TM)
    if M_pad != M:
        patches = jnp.pad(patches, ((0, 0), (0, M_pad - M), (0, 0)))
    out = pl.pallas_call(
        _conv_pool_kernel,
        out_shape=jax.ShapeDtypeStruct((M_pad, C), jnp.float32),
        grid=(M_pad // TM,),
        in_specs=[
            pl.BlockSpec((4, TM, K), lambda i: (0, i, 0)),
            pl.BlockSpec((K, C), lambda i: (0, 0)),
            pl.BlockSpec((1, C), lambda i: (0, 0)),
        ],
        out_specs=pl.BlockSpec((TM, C), lambda i: (i, 0)),
        compiler_params=pltpu.CompilerParams(
            dimension_semantics=("parallel",),
            vmem_limit_bytes=_VMEM_LIMIT,
        ),
        cost_estimate=pl.CostEstimate(
            flops=2 * 4 * M_pad * K * C,
            transcendentals=0,
            bytes_accessed=4 * (4 * M_pad * K + K * C + C + M_pad * C),
        ),
    )(patches, w, b)
    return out[:M] if M_pad != M else out


def fc_head(x_flat, w1, b1, w2, b2, *, tile_rows=512):
    N, K1 = x_flat.shape
    H1 = w1.shape[1]
    H2 = w2.shape[1]
    TN = min(tile_rows, _round_up(N, 8))
    N_pad = _round_up(N, TN)
    if N_pad != N:
        x_flat = jnp.pad(x_flat, ((0, N_pad - N), (0, 0)))
    out = pl.pallas_call(
        _fc_head_kernel,
        out_shape=jax.ShapeDtypeStruct((N_pad, H2), jnp.float32),
        grid=(N_pad // TN,),
        in_specs=[
            pl.BlockSpec((TN, K1), lambda i: (i, 0)),
            pl.BlockSpec((K1, H1), lambda i: (0, 0)),
            pl.BlockSpec((1, H1), lambda i: (0, 0)),
            pl.BlockSpec((H1, H2), lambda i: (0, 0)),
            pl.BlockSpec((1, H2), lambda i: (0, 0)),
        ],
        out_specs=pl.BlockSpec((TN, H2), lambda i: (i, 0)),
        compiler_params=pltpu.CompilerParams(
            dimension_semantics=("parallel",),
            vmem_limit_bytes=_VMEM_LIMIT,
        ),
        cost_estimate=pl.CostEstimate(
            flops=2 * N_pad * (K1 * H1 + H1 * H2),
            transcendentals=N_pad * H2,
            bytes_accessed=4 * (N_pad * K1 + K1 * H1 + H1 + H1 * H2 + H2 + N_pad * H2),
        ),
    )(x_flat, w1, b1, w2, b2)
    return out[:N] if N_pad != N else out


# ---------------------------------------------------------------------------
# Glue: corner-major im2col, parameter setup, forward
# ---------------------------------------------------------------------------

def im2col_pooled(x_nhwc, k):
    """im2col for conv(k) followed by 2x2 maxpool, corner-major.

    Returns (4, N*Hp*Wp, k*k*C) with patch columns in (kh, kw, Cin) order,
    rows ordered (n, hp, wp), and the leading axis holding the 4 corners of each
    pooling window.  Same total size as plain im2col — no 4x expansion.
    """
    N, H, W, C = x_nhwc.shape
    Ho, Wo = H - k + 1, W - k + 1
    Hp, Wp = Ho // 2, Wo // 2
    slices = [x_nhwc[:, i:i + Ho, j:j + Wo, :] for i in range(k) for j in range(k)]
    patches = jnp.stack(slices, axis=3)                     # (N, Ho, Wo, k*k, C)
    corners = jnp.stack(
        [patches[:, dh::2, dw::2, :, :] for dh in (0, 1) for dw in (0, 1)],
        axis=0,
    )                                                       # (4, N, Hp, Wp, k*k, C)
    return corners.reshape(4, N * Hp * Wp, k * k * C), (Hp, Wp)


def init_params(key, conv1_filters=10, conv2_filters=20, fc1_nodes=50):
    ks = jax.random.split(key, 8)
    # PyTorch-layout weights (deterministic synthetic init), converted to matmul layout.
    w_conv1 = 0.1 * jax.random.normal(ks[0], (conv1_filters, 1, 5, 5), jnp.float32)
    b_conv1 = 0.01 * jax.random.normal(ks[1], (conv1_filters,), jnp.float32)
    w_conv2 = 0.1 * jax.random.normal(ks[2], (conv2_filters, conv1_filters, 5, 5), jnp.float32)
    b_conv2 = 0.01 * jax.random.normal(ks[3], (conv2_filters,), jnp.float32)
    w_fc1 = 0.1 * jax.random.normal(ks[4], (fc1_nodes, conv2_filters * 4 * 4), jnp.float32)
    b_fc1 = 0.01 * jax.random.normal(ks[5], (fc1_nodes,), jnp.float32)
    w_fc2 = 0.1 * jax.random.normal(ks[6], (10, fc1_nodes), jnp.float32)
    b_fc2 = 0.01 * jax.random.normal(ks[7], (10,), jnp.float32)

    # fc1 weight rows are permuted from PyTorch's (C, H, W) flatten order to (H, W, C)
    # order so the forward pass can flatten the NHWC activation directly (no per-forward
    # transpose on the activation path).
    w_fc1_t = w_fc1.T                                        # (320, 50), rows = (c, h, w)
    w_fc1_hwc = (w_fc1_t.reshape(conv2_filters, 4, 4, fc1_nodes)
                 .transpose(1, 2, 0, 3)
                 .reshape(conv2_filters * 16, fc1_nodes))    # rows = (h, w, c)

    return {
        # conv weights: (Cout,Cin,kh,kw) -> (kh,kw,Cin,Cout) -> (kh*kw*Cin, Cout)
        "w1": jnp.transpose(w_conv1, (2, 3, 1, 0)).reshape(25 * 1, conv1_filters),
        "b1": b_conv1.reshape(1, conv1_filters),
        "w2": jnp.transpose(w_conv2, (2, 3, 1, 0)).reshape(25 * conv1_filters, conv2_filters),
        "b2": b_conv2.reshape(1, conv2_filters),
        "fc1_w": w_fc1_hwc,
        "fc1_b": b_fc1.reshape(1, fc1_nodes),
        "fc2_w": w_fc2.T,
        "fc2_b": b_fc2.reshape(1, 10),
    }


def my_network_forward(x_nchw, params):
    N = x_nchw.shape[0]
    c1 = params["b1"].shape[1]
    c2 = params["b2"].shape[1]

    x = jnp.transpose(x_nchw, (0, 2, 3, 1))                        # NCHW -> NHWC

    # conv1 + relu + pool (fused kernel)
    p1, (hp1, wp1) = im2col_pooled(x, 5)                           # (4, N*144, 25)
    h1 = conv_relu_pool(p1, params["w1"], params["b1"], tile_rows=1024)   # (N*144, 10)
    h1 = h1.reshape(N, hp1, wp1, c1)                               # (N, 12, 12, 10)

    # conv2 + relu + pool (fused kernel)
    p2, (hp2, wp2) = im2col_pooled(h1, 5)                          # (4, N*16, 250)
    h2 = conv_relu_pool(p2, params["w2"], params["b2"], tile_rows=512)    # (N*16, 20)

    # dropout: identity in eval mode
    # TODO(synk): training-mode dropout (pltpu.prng_seed + stateful_bernoulli) not emitted.

    # flatten directly in (H, W, C) order — fc1_w rows were permuted at init to match.
    flat = h2.reshape(N, hp2 * wp2 * c2)                           # (N, 320)

    return fc_head(flat, params["fc1_w"], params["fc1_b"],
                   params["fc2_w"], params["fc2_b"])               # (N, 10) log-probs


if __name__ == "__main__":
    key = jax.random.PRNGKey(0)
    k_param, k_input = jax.random.split(key)

    params = init_params(k_param)
    x = jax.random.normal(k_input, (2, 1, 28, 28), jnp.float32)    # NCHW like PyTorch

    fwd = jax.jit(my_network_forward)
    out = jax.block_until_ready(fwd(x, params))

    assert out.shape == (2, 10)
    # sanity: rows of log_softmax should exponentiate to ~1
    assert jnp.allclose(jnp.exp(out).sum(axis=1), 1.0, atol=1e-4)
    print("KERNEL_OK")
</pallas_src>

<mosaic_0001>
module attributes {stable_mosaic.version = 11 : i64} {
  func.func @_conv_pool_kernel(%arg0: i32, %arg1: memref<4x288x25xf32, #tpu.memory_space<vmem>>, %arg2: memref<25x10xf32, #tpu.memory_space<vmem>>, %arg3: memref<1x10xf32, #tpu.memory_space<vmem>>, %arg4: memref<288x10xf32, #tpu.memory_space<vmem>>) attributes {dimension_semantics = [#tpu.dimension_semantics<parallel>], iteration_bounds = array<i64: 1>, scalar_prefetch = 0 : i64, scratch_operands = 0 : i64, tpu.core_type = #tpu.core_type<tc>, window_params = [{transform_indices = @transform_0, window_bounds = array<i64: 4, 288, 25>}, {pipeline_mode = #tpu.pipeline_mode<synchronous>, transform_indices = @transform_1, window_bounds = array<i64: 25, 10>}, {pipeline_mode = #tpu.pipeline_mode<synchronous>, transform_indices = @transform_2, window_bounds = array<i64: 1, 10>}, {transform_indices = @transform_3, window_bounds = array<i64: 288, 10>}]} {
    %c0 = arith.constant 0 : index
    %c0_0 = arith.constant 0 : index
    %0 = vector.load %arg2[%c0, %c0_0] : memref<25x10xf32, #tpu.memory_space<vmem>>, vector<25x10xf32>
    %c0_1 = arith.constant 0 : index
    %c0_2 = arith.constant 0 : index
    %c0_3 = arith.constant 0 : index
    %1 = vector.load %arg1[%c0_1, %c0_2, %c0_3] : memref<4x288x25xf32, #tpu.memory_space<vmem>>, vector<1x288x25xf32>
    %2 = vector.shape_cast %1 : vector<1x288x25xf32> to vector<288x25xf32>
    %cst = arith.constant dense<0.000000e+00> : vector<288x10xf32>
    %3 = tpu.matmul %2, %0, %cst {dimension_numbers = #tpu.dot_dimension_numbers<[1], [0], [0], [1], [0, 0, 1, 1], [], []>} : vector<288x25xf32>, vector<25x10xf32>, vector<288x10xf32> -> vector<288x10xf32>
    %c1 = arith.constant 1 : index
    %c0_4 = arith.constant 0 : index
    %c0_5 = arith.constant 0 : index
    %4 = vector.load %arg1[%c1, %c0_4, %c0_5] : memref<4x288x25xf32, #tpu.memory_space<vmem>>, vector<1x288x25xf32>
    %5 = vector.shape_cast %4 : vector<1x288x25xf32> to vector<288x25xf32>
    %cst_6 = arith.constant dense<0.000000e+00> : vector<288x10xf32>
    %6 = tpu.matmul %5, %0, %cst_6 {dimension_numbers = #tpu.dot_dimension_numbers<[1], [0], [0], [1], [0, 0, 1, 1], [], []>} : vector<288x25xf32>, vector<25x10xf32>, vector<288x10xf32> -> vector<288x10xf32>
    %7 = arith.maximumf %3, %6 : vector<288x10xf32>
    %c2 = arith.constant 2 : index
    %c0_7 = arith.constant 0 : index
    %c0_8 = arith.constant 0 : index
    %8 = vector.load %arg1[%c2, %c0_7, %c0_8] : memref<4x288x25xf32, #tpu.memory_space<vmem>>, vector<1x288x25xf32>
    %9 = vector.shape_cast %8 : vector<1x288x25xf32> to vector<288x25xf32>
    %cst_9 = arith.constant dense<0.000000e+00> : vector<288x10xf32>
    %10 = tpu.matmul %9, %0, %cst_9 {dimension_numbers = #tpu.dot_dimension_numbers<[1], [0], [0], [1], [0, 0, 1, 1], [], []>} : vector<288x25xf32>, vector<25x10xf32>, vector<288x10xf32> -> vector<288x10xf32>
    %11 = arith.maximumf %7, %10 : vector<288x10xf32>
    %c3 = arith.constant 3 : index
    %c0_10 = arith.constant 0 : index
    %c0_11 = arith.constant 0 : index
    %12 = vector.load %arg1[%c3, %c0_10, %c0_11] : memref<4x288x25xf32, #tpu.memory_space<vmem>>, vector<1x288x25xf32>
    %13 = vector.shape_cast %12 : vector<1x288x25xf32> to vector<288x25xf32>
    %cst_12 = arith.constant dense<0.000000e+00> : vector<288x10xf32>
    %14 = tpu.matmul %13, %0, %cst_12 {dimension_numbers = #tpu.dot_dimension_numbers<[1], [0], [0], [1], [0, 0, 1, 1], [], []>} : vector<288x25xf32>, vector<25x10xf32>, vector<288x10xf32> -> vector<288x10xf32>
    %15 = arith.maximumf %11, %14 : vector<288x10xf32>
    %c0_13 = arith.constant 0 : index
    %c0_14 = arith.constant 0 : index
    %16 = vector.load %arg3[%c0_13, %c0_14] : memref<1x10xf32, #tpu.memory_space<vmem>>, vector<1x10xf32>
    %17 = vector.broadcast %16 : vector<1x10xf32> to vector<288x10xf32>
    %18 = arith.addf %15, %17 : vector<288x10xf32>
    %cst_15 = arith.constant 0.000000e+00 : f32
    %19 = vector.broadcast %cst_15 : f32 to vector<288x10xf32>
    %20 = arith.maximumf %18, %19 : vector<288x10xf32>
    %c0_16 = arith.constant 0 : index
    %c0_17 = arith.constant 0 : index
    %21 = vector.load %arg4[%c0_16, %c0_17] : memref<288x10xf32, #tpu.memory_space<vmem>>, vector<288x10xf32>
    tpu.vector_store %arg4[%c0_16, %c0_17], %20 {strides = array<i32>} : memref<288x10xf32, #tpu.memory_space<vmem>>, vector<288x10xf32>,
    return
  }
  func.func @transform_0(%arg0: i32) -> (i32, i32, i32) {
    %c0_i32 = arith.constant 0 : i32
    %c0_i32_0 = arith.constant 0 : i32
    %c0_i32_1 = arith.constant 0 : i32
    return %c0_i32, %arg0, %c0_i32_0 : i32, i32, i32
  }
  func.func @transform_1(%arg0: i32) -> (i32, i32) {
    %c0_i32 = arith.constant 0 : i32
    %c0_i32_0 = arith.constant 0 : i32
    %c0_i32_1 = arith.constant 0 : i32
    return %c0_i32, %c0_i32_0 : i32, i32
  }
  func.func @transform_2(%arg0: i32) -> (i32, i32) {
    %c0_i32 = arith.constant 0 : i32
    %c0_i32_0 = arith.constant 0 : i32
    %c0_i32_1 = arith.constant 0 : i32
    return %c0_i32, %c0_i32_0 : i32, i32
  }
  func.func @transform_3(%arg0: i32) -> (i32, i32) {
    %c0_i32 = arith.constant 0 : i32
    %c0_i32_0 = arith.constant 0 : i32
    return %arg0, %c0_i32 : i32, i32
  }
}

module attributes {stable_mosaic.version = 11 : i64} {
  func.func @_conv_pool_kernel(%arg0: i32, %arg1: memref<4x32x250xf32, #tpu.memory_space<vmem>>, %arg2: memref<250x20xf32, #tpu.memory_space<vmem>>, %arg3: memref<1x20xf32, #tpu.memory_space<vmem>>, %arg4: memref<32x20xf32, #tpu.memory_space<vmem>>) attributes {dimension_semantics = [#tpu.dimension_semantics<parallel>], iteration_bounds = array<i64: 1>, scalar_prefetch = 0 : i64, scratch_operands = 0 : i64, tpu.core_type = #tpu.core_type<tc>, window_params = [{transform_indices = @transform_0, window_bounds = array<i64: 4, 32, 250>}, {pipeline_mode = #tpu.pipeline_mode<synchronous>, transform_indices = @transform_1, window_bounds = array<i64: 250, 20>}, {pipeline_mode = #tpu.pipeline_mode<synchronous>, transform_indices = @transform_2, window_bounds = array<i64: 1, 20>}, {transform_indices = @transform_3, window_bounds = array<i64: 32, 20>}]} {
    %c0 = arith.constant 0 : index
    %c0_0 = arith.constant 0 : index
    %0 = vector.load %arg2[%c0, %c0_0] : memref<250x20xf32, #tpu.memory_space<vmem>>, vector<250x20xf32>
    %c0_1 = arith.constant 0 : index
    %c0_2 = arith.constant 0 : index
    %c0_3 = arith.constant 0 : index
    %1 = vector.load %arg1[%c0_1, %c0_2, %c0_3] : memref<4x32x250xf32, #tpu.memory_space<vmem>>, vector<1x32x250xf32>
    %2 = vector.shape_cast %1 : vector<1x32x250xf32> to vector<32x250xf32>
    %cst = arith.constant dense<0.000000e+00> : vector<32x20xf32>
    %3 = tpu.matmul %2, %0, %cst {dimension_numbers = #tpu.dot_dimension_numbers<[1], [0], [0], [1], [0, 0, 1, 1], [], []>} : vector<32x250xf32>, vector<250x20xf32>, vector<32x20xf32> -> vector<32x20xf32>
    %c1 = arith.constant 1 : index
    %c0_4 = arith.constant 0 : index
    %c0_5 = arith.constant 0 : index
    %4 = vector.load %arg1[%c1, %c0_4, %c0_5] : memref<4x32x250xf32, #tpu.memory_space<vmem>>, vector<1x32x250xf32>
    %5 = vector.shape_cast %4 : vector<1x32x250xf32> to vector<32x250xf32>
    %cst_6 = arith.constant dense<0.000000e+00> : vector<32x20xf32>
    %6 = tpu.matmul %5, %0, %cst_6 {dimension_numbers = #tpu.dot_dimension_numbers<[1], [0], [0], [1], [0, 0, 1, 1], [], []>} : vector<32x250xf32>, vector<250x20xf32>, vector<32x20xf32> -> vector<32x20xf32>
    %7 = arith.maximumf %3, %6 : vector<32x20xf32>
    %c2 = arith.constant 2 : index
    %c0_7 = arith.constant 0 : index
    %c0_8 = arith.constant 0 : index
    %8 = vector.load %arg1[%c2, %c0_7, %c0_8] : memref<4x32x250xf32, #tpu.memory_space<vmem>>, vector<1x32x250xf32>
    %9 = vector.shape_cast %8 : vector<1x32x250xf32> to vector<32x250xf32>
    %cst_9 = arith.constant dense<0.000000e+00> : vector<32x20xf32>
    %10 = tpu.matmul %9, %0, %cst_9 {dimension_numbers = #tpu.dot_dimension_numbers<[1], [0], [0], [1], [0, 0, 1, 1], [], []>} : vector<32x250xf32>, vector<250x20xf32>, vector<32x20xf32> -> vector<32x20xf32>
    %11 = arith.maximumf %7, %10 : vector<32x20xf32>
    %c3 = arith.constant 3 : index
    %c0_10 = arith.constant 0 : index
    %c0_11 = arith.constant 0 : index
    %12 = vector.load %arg1[%c3, %c0_10, %c0_11] : memref<4x32x250xf32, #tpu.memory_space<vmem>>, vector<1x32x250xf32>
    %13 = vector.shape_cast %12 : vector<1x32x250xf32> to vector<32x250xf32>
    %cst_12 = arith.constant dense<0.000000e+00> : vector<32x20xf32>
    %14 = tpu.matmul %13, %0, %cst_12 {dimension_numbers = #tpu.dot_dimension_numbers<[1], [0], [0], [1], [0, 0, 1, 1], [], []>} : vector<32x250xf32>, vector<250x20xf32>, vector<32x20xf32> -> vector<32x20xf32>
    %15 = arith.maximumf %11, %14 : vector<32x20xf32>
    %c0_13 = arith.constant 0 : index
    %c0_14 = arith.constant 0 : index
    %16 = vector.load %arg3[%c0_13, %c0_14] : memref<1x20xf32, #tpu.memory_space<vmem>>, vector<1x20xf32>
    %17 = vector.broadcast %16 : vector<1x20xf32> to vector<32x20xf32>
    %18 = arith.addf %15, %17 : vector<32x20xf32>
    %cst_15 = arith.constant 0.000000e+00 : f32
    %19 = vector.broadcast %cst_15 : f32 to vector<32x20xf32>
    %20 = arith.maximumf %18, %19 : vector<32x20xf32>
    %c0_16 = arith.constant 0 : index
    %c0_17 = arith.constant 0 : index
    %21 = vector.load %arg4[%c0_16, %c0_17] : memref<32x20xf32, #tpu.memory_space<vmem>>, vector<32x20xf32>
    tpu.vector_store %arg4[%c0_16, %c0_17], %20 {strides = array<i32>} : memref<32x20xf32, #tpu.memory_space<vmem>>, vector<32x20xf32>,
    return
  }
  func.func @transform_0(%arg0: i32) -> (i32, i32, i32) {
    %c0_i32 = arith.constant 0 : i32
    %c0_i32_0 = arith.constant 0 : i32
    %c0_i32_1 = arith.constant 0 : i32
    return %c0_i32, %arg0, %c0_i32_0 : i32, i32, i32
  }
  func.func @transform_1(%arg0: i32) -> (i32, i32) {
    %c0_i32 = arith.constant 0 : i32
    %c0_i32_0 = arith.constant 0 : i32
    %c0_i32_1 = arith.constant 0 : i32
    return %c0_i32, %c0_i32_0 : i32, i32
  }
  func.func @transform_2(%arg0: i32) -> (i32, i32) {
    %c0_i32 = arith.constant 0 : i32
    %c0_i32_0 = arith.constant 0 : i32
    %c0_i32_1 = arith.constant 0 : i32
    return %c0_i32, %c0_i32_0 : i32, i32
  }
  func.func @transform_3(%arg0: i32) -> (i32, i32) {
    %c0_i32 = arith.constant 0 : i32
    %c0_i32_0 = arith.constant 0 : i32
    return %arg0, %c0_i32 : i32, i32
  }
}

module attributes {stable_mosaic.version = 11 : i64} {
  func.func @_fc_head_kernel(%arg0: i32, %arg1: memref<8x320xf32, #tpu.memory_space<vmem>>, %arg2: memref<320x50xf32, #tpu.memory_space<vmem>>, %arg3: memref<1x50xf32, #tpu.memory_space<vmem>>, %arg4: memref<50x10xf32, #tpu.memory_space<vmem>>, %arg5: memref<1x10xf32, #tpu.memory_space<vmem>>, %arg6: memref<8x10xf32, #tpu.memory_space<vmem>>) attributes {dimension_semantics = [#tpu.dimension_semantics<parallel>], iteration_bounds = array<i64: 1>, scalar_prefetch = 0 : i64, scratch_operands = 0 : i64, tpu.core_type = #tpu.core_type<tc>, window_params = [{transform_indices = @transform_0, window_bounds = array<i64: 8, 320>}, {pipeline_mode = #tpu.pipeline_mode<synchronous>, transform_indices = @transform_1, window_bounds = array<i64: 320, 50>}, {pipeline_mode = #tpu.pipeline_mode<synchronous>, transform_indices = @transform_2, window_bounds = array<i64: 1, 50>}, {pipeline_mode = #tpu.pipeline_mode<synchronous>, transform_indices = @transform_3, window_bounds = array<i64: 50, 10>}, {pipeline_mode = #tpu.pipeline_mode<synchronous>, transform_indices = @transform_4, window_bounds = array<i64: 1, 10>}, {transform_indices = @transform_5, window_bounds = array<i64: 8, 10>}]} {
    %c0 = arith.constant 0 : index
    %c0_0 = arith.constant 0 : index
    %0 = vector.load %arg1[%c0, %c0_0] : memref<8x320xf32, #tpu.memory_space<vmem>>, vector<8x320xf32>
    %c0_1 = arith.constant 0 : index
    %c0_2 = arith.constant 0 : index
    %1 = vector.load %arg2[%c0_1, %c0_2] : memref<320x50xf32, #tpu.memory_space<vmem>>, vector<320x50xf32>
    %cst = arith.constant dense<0.000000e+00> : vector<8x50xf32>
    %2 = tpu.matmul %0, %1, %cst {dimension_numbers = #tpu.dot_dimension_numbers<[1], [0], [0], [1], [0, 0, 1, 1], [], []>} : vector<8x320xf32>, vector<320x50xf32>, vector<8x50xf32> -> vector<8x50xf32>
    %c0_3 = arith.constant 0 : index
    %c0_4 = arith.constant 0 : index
    %3 = vector.load %arg3[%c0_3, %c0_4] : memref<1x50xf32, #tpu.memory_space<vmem>>, vector<1x50xf32>
    %4 = vector.broadcast %3 : vector<1x50xf32> to vector<8x50xf32>
    %5 = arith.addf %2, %4 : vector<8x50xf32>
    %cst_5 = arith.constant 0.000000e+00 : f32
    %6 = vector.broadcast %cst_5 : f32 to vector<8x50xf32>
    %7 = arith.maximumf %5, %6 : vector<8x50xf32>
    %c0_6 = arith.constant 0 : index
    %c0_7 = arith.constant 0 : index
    %8 = vector.load %arg4[%c0_6, %c0_7] : memref<50x10xf32, #tpu.memory_space<vmem>>, vector<50x10xf32>
    %cst_8 = arith.constant dense<0.000000e+00> : vector<8x10xf32>
    %9 = tpu.matmul %7, %8, %cst_8 {dimension_numbers = #tpu.dot_dimension_numbers<[1], [0], [0], [1], [0, 0, 1, 1], [], []>} : vector<8x50xf32>, vector<50x10xf32>, vector<8x10xf32> -> vector<8x10xf32>
    %c0_9 = arith.constant 0 : index
    %c0_10 = arith.constant 0 : index
    %10 = vector.load %arg5[%c0_9, %c0_10] : memref<1x10xf32, #tpu.memory_space<vmem>>, vector<1x10xf32>
    %11 = vector.broadcast %10 : vector<1x10xf32> to vector<8x10xf32>
    %12 = arith.addf %9, %11 : vector<8x10xf32>
    %cst_11 = arith.constant dense<0xFF800000> : vector<8xf32>
    %13 = vector.multi_reduction <maximumf>, %12, %cst_11 [1] : vector<8x10xf32> to vector<8xf32>
    %14 = vector.shape_cast %13 : vector<8xf32> to vector<8x1xf32>
    %15 = vector.broadcast %14 : vector<8x1xf32> to vector<8x10xf32>
    %16 = arith.subf %12, %15 : vector<8x10xf32>
    %17 = math.exp %16 : vector<8x10xf32>
    %cst_12 = arith.constant dense<0.000000e+00> : vector<8xf32>
    %18 = vector.multi_reduction <add>, %17, %cst_12 [1] : vector<8x10xf32> to vector<8xf32>
    %19 = vector.shape_cast %18 : vector<8xf32> to vector<8x1xf32>
    %20 = math.log %19 : vector<8x1xf32>
    %21 = arith.addf %14, %20 : vector<8x1xf32>
    %22 = vector.broadcast %21 : vector<8x1xf32> to vector<8x10xf32>
    %23 = arith.subf %12, %22 : vector<8x10xf32>
    %c0_13 = arith.constant 0 : index
    %c0_14 = arith.constant 0 : index
    %24 = vector.load %arg6[%c0_13, %c0_14] : memref<8x10xf32, #tpu.memory_space<vmem>>, vector<8x10xf32>
    tpu.vector_store %arg6[%c0_13, %c0_14], %23 {strides = array<i32>} : memref<8x10xf32, #tpu.memory_space<vmem>>, vector<8x10xf32>,
    return
  }
  func.func @transform_0(%arg0: i32) -> (i32, i32) {
    %c0_i32 = arith.constant 0 : i32
    %c0_i32_0 = arith.constant 0 : i32
    return %arg0, %c0_i32 : i32, i32
  }
  func.func @transform_1(%arg0: i32) -> (i32, i32) {
    %c0_i32 = arith.constant 0 : i32
    %c0_i32_0 = arith.constant 0 : i32
    %c0_i32_1 = arith.constant 0 : i32
    return %c0_i32, %c0_i32_0 : i32, i32
  }
  func.func @transform_2(%arg0: i32) -> (i32, i32) {
    %c0_i32 = arith.constant 0 : i32
    %c0_i32_0 = arith.constant 0 : i32
    %c0_i32_1 = arith.constant 0 : i32
    return %c0_i32, %c0_i32_0 : i32, i32
  }
  func.func @transform_3(%arg0: i32) -> (i32, i32) {
    %c0_i32 = arith.constant 0 : i32
    %c0_i32_0 = arith.constant 0 : i32
    %c0_i32_1 = arith.constant 0 : i32
    return %c0_i32, %c0_i32_0 : i32, i32
  }
  func.func @transform_4(%arg0: i32) -> (i32, i32) {
    %c0_i32 = arith.constant 0 : i32
    %c0_i32_0 = arith.constant 0 : i32
    %c0_i32_1 = arith.constant 0 : i32
    return %c0_i32, %c0_i32_0 : i32, i32
  }
  func.func @transform_5(%arg0: i32) -> (i32, i32) {
    %c0_i32 = arith.constant 0 : i32
    %c0_i32_0 = arith.constant 0 : i32
    return %arg0, %c0_i32 : i32, i32
  }
}

</mosaic_0001>

<llo_original>
// kernel: my_network_forward.3
$region0: #{my_network_forward.3}
  #allocation0 [shape = 'u32[]', space=smem, size = 0x4, offset = 0x4, fixed_abs, tag = 'smem constant byte address 0x4 - core index']
  #allocation1 [shape = 'u32[144,128]{1,0:T(1,128)}', space=vmem, size = 0x12000, scoped, tag = 'internal scratch']
  %s0 = inlined_call_operand.vmem [shape: f32[4,288,25], index: 0, kind: input, shape index: {}]
  %s1 = inlined_call_operand.vmem [shape: f32[25,10], index: 1, kind: input, shape index: {}]
  %s2 = inlined_call_operand.vmem [shape: f32[1,10], index: 2, kind: input, shape index: {}]
  %s3 = inlined_call_operand.vmem [shape: f32[288,10], index: 3, kind: output, shape index: {}]
  %s4 = sld [smem:[#allocation0]]
  $region22: #{my_network_forward.3} parent=0
    _
  %s6 = ssub.s32 1, %s4
  %s7 = scalar_select 0, %s6, %s4
  // Predicated region
  $region2: #{my_network_forward.3} parent=0 // pred_check
    _
  $region3: #{my_network_forward.3} parent=0 // pred_check_branch
    %9 = sbr.rel (0) target = $region5
  $region4: #{my_network_forward.3} parent=0 // pred_region
    _
  $region5: #{my_network_forward.3} parent=0 // pred_fallthru
    _
  // Predicated region
  $region6: #{my_network_forward.3} parent=0 // pred_check
    _
  $region7: #{my_network_forward.3} parent=0 // pred_check_branch
    %11 = sbr.rel (0) target = $region9
  $region8: #{my_network_forward.3} parent=0 // pred_region
    _
  $region9: #{my_network_forward.3} parent=0 // pred_fallthru
    _
  // Predicated region
  $region10: #{my_network_forward.3} parent=0 // pred_check
    _
  $region11: #{my_network_forward.3} parent=0 // pred_check_branch
    %13 = sbr.rel (0) target = $region13
  $region12: #{my_network_forward.3} parent=0 // pred_region
    _
  $region13: #{my_network_forward.3} parent=0 // pred_fallthru
    _
  %v14 = vld [vmem:[%s1] sm:$0xff]
  %v15 = vld [vmem:[%s1 + $0x8] sm:$0xff]
  %v16 = vld [vmem:[%s1 + $0x10] sm:$0xff]
  %v17 = vld [vmem:[%s1 + $0x18] sm:$0x1]
  %v18 = vld [vmem:[%s0] sm:$0xff]
  %v19 = vld [vmem:[%s0 + $0x8] sm:$0xff]
  %v20 = vld [vmem:[%s0 + $0x10] sm:$0xff]
  %v21 = vld [vmem:[%s0 + $0x18] sm:$0xff]
  %v22 = vld [vmem:[%s0 + $0x20] sm:$0xff]
  %v23 = vld [vmem:[%s0 + $0x28] sm:$0xff]
  %v24 = vld [vmem:[%s0 + $0x30] sm:$0xff]
  %v25 = vld [vmem:[%s0 + $0x38] sm:$0xff]
  %v26 = vld [vmem:[%s0 + $0x40] sm:$0xff]
  %v27 = vld [vmem:[%s0 + $0x48] sm:$0xff]
  %v28 = vld [vmem:[%s0 + $0x50] sm:$0xff]
  %v29 = vld [vmem:[%s0 + $0x58] sm:$0xff]
  %v30 = vld [vmem:[%s0 + $0x60] sm:$0xff]
  %v31 = vld [vmem:[%s0 + $0x68] sm:$0xff]
  %v32 = vld [vmem:[%s0 + $0x70] sm:$0xff]
  %v33 = vld [vmem:[%s0 + $0x78] sm:$0xff]
  %v34 = vld [vmem:[%s0 + $0x80] sm:$0xff]
  %v35 = vld [vmem:[%s0 + $0x88] sm:$0xff]
  %v36 = vld [vmem:[%s0 + $0x90] sm:$0xff]
  %v37 = vld [vmem:[%s0 + $0x98] sm:$0xff]
  %v38 = vld [vmem:[%s0 + $0xa0] sm:$0xff]
  %v39 = vld [vmem:[%s0 + $0xa8] sm:$0xff]
  %v40 = vld [vmem:[%s0 + $0xb0] sm:$0xff]
  %v41 = vld [vmem:[%s0 + $0xb8] sm:$0xff]
  %v42 = vld [vmem:[%s0 + $0xc0] sm:$0xff]
  %v43 = vld [vmem:[%s0 + $0xc8] sm:$0xff]
  %v44 = vld [vmem:[%s0 + $0xd0] sm:$0xff]
  %v45 = vld [vmem:[%s0 + $0xd8] sm:$0xff]
  %v46 = vld [vmem:[%s0 + $0xe0] sm:$0xff]
  %v47 = vld [vmem:[%s0 + $0xe8] sm:$0xff]
  %v48 = vld [vmem:[%s0 + $0xf0] sm:$0xff]
  %v49 = vld [vmem:[%s0 + $0xf8] sm:$0xff]
  %v50 = vld [vmem:[%s0 + $0x100] sm:$0xff]
  %v51 = vld [vmem:[%s0 + $0x108] sm:$0xff]
  %v52 = vld [vmem:[%s0 + $0x110] sm:$0xff]
  %v53 = vld [vmem:[%s0 + $0x118] sm:$0xff]
  %vm54 = vcmask 203776
  %v56 = vsel %vm54, %v18, 0
  %v59 = vsel %vm54, %v19, 0
  %v62 = vsel %vm54, %v20, 0
  %v65 = vsel %vm54, %v21, 0
  %v68 = vsel %vm54, %v22, 0
  %v71 = vsel %vm54, %v23, 0
  %v74 = vsel %vm54, %v24, 0
  %v77 = vsel %vm54, %v25, 0
  %v80 = vsel %vm54, %v26, 0
  %v83 = vsel %vm54, %v27, 0
  %v86 = vsel %vm54, %v28, 0
  %v89 = vsel %vm54, %v29, 0
  %v92 = vsel %vm54, %v30, 0
  %v95 = vsel %vm54, %v31, 0
  %v98 = vsel %vm54, %v32, 0
  %v101 = vsel %vm54, %v33, 0
  %v104 = vsel %vm54, %v34, 0
  %v107 = vsel %vm54, %v35, 0
  %v110 = vsel %vm54, %v36, 0
  %v113 = vsel %vm54, %v37, 0
  %v116 = vsel %vm54, %v38, 0
  %v119 = vsel %vm54, %v39, 0
  %v122 = vsel %vm54, %v40, 0
  %v125 = vsel %vm54, %v41, 0
  %v128 = vsel %vm54, %v42, 0
  %v131 = vsel %vm54, %v43, 0
  %v134 = vsel %vm54, %v44, 0
  %v137 = vsel %vm54, %v45, 0
  %v140 = vsel %vm54, %v46, 0
  %v143 = vsel %vm54, %v47, 0
  %v146 = vsel %vm54, %v48, 0
  %v149 = vsel %vm54, %v49, 0
  %v152 = vsel %vm54, %v50, 0
  %v155 = vsel %vm54, %v51, 0
  %v158 = vsel %vm54, %v52, 0
  %v161 = vsel %vm54, %v53, 0
  %vm163 = vcmask 1040384
  %v165 = vsel %vm163, %v17, 0
  %167 = vmatprep.subr.mxu0 0.0
  %168 = vmatpush1.msra.mxu0 %v14
  %169 = vmatprep.subr.mxu0 0.0
  %170 = vmatpush1.msra.mxu0 %v15
  %171 = vmatprep.subr.mxu0 0.0
  %172 = vmatpush1.msra.mxu0 %v16
  %173 = vmatprep.subr.mxu0 0.0
  %174 = vmatpush1.msra.mxu0 %v165
  %175 = vmatprep.subr.mxu0 0.0
  %176 = vmatpush1.msra.mxu0 0.0
  %177 = vmatprep.subr.mxu0 0.0
  %178 = vmatpush1.msra.mxu0 0.0
  %179 = vmatprep.subr.mxu0 0.0
  %180 = vmatpush1.msra.mxu0 0.0
  %181 = vmatprep.subr.mxu0 0.0
  %182 = vmatpush1.msra.mxu0 0.0
  %183 = vmatprep.subr.mxu0 0.0
  %184 = vmatpush1.msra.mxu0 0.0
  %185 = vmatprep.subr.mxu0 0.0
  %186 = vmatpush1.msra.mxu0 0.0
  %187 = vmatprep.subr.mxu0 0.0
  %188 = vmatpush1.msra.mxu0 0.0
  %189 = vmatprep.subr.mxu0 0.0
  %190 = vmatpush1.msra.mxu0 0.0
  %191 = vmatprep.subr.mxu0 0.0
  %192 = vmatpush1.msra.mxu0 0.0
  %193 = vmatprep.subr.mxu0 0.0
  %194 = vmatpush1.msra.mxu0 0.0
  %195 = vmatprep.subr.mxu0 0.0
  %196 = vmatpush1.msra.mxu0 0.0
  %197 = vmatprep.subr.mxu0 0.0
  %198 = vmatpush1.msra.mxu0 0.0
  %199 = vmatprep.subr.mxu0 0.0
  %200 = vmatpush1.msra.mxu0 0.0
  %201 = vmatprep.subr.mxu0 0.0
  %202 = vmatpush1.msra.mxu0 0.0
  %203 = vmatprep.subr.mxu0 0.0
  %204 = vmatpush1.msra.mxu0 0.0
  %205 = vmatprep.subr.mxu0 0.0
  %206 = vmatpush1.msra.mxu0 0.0
  %207 = vmatprep.subr.mxu0 0.0
  %208 = vmatpush1.msra.mxu0 0.0
  %209 = vmatprep.subr.mxu0 0.0
  %210 = vmatpush1.msra.mxu0 0.0
  %211 = vmatprep.subr.mxu0 0.0
  %212 = vmatpush1.msra.mxu0 0.0
  %213 = vmatprep.subr.mxu0 0.0
  %214 = vmatpush1.msra.mxu0 0.0
  %215 = vmatprep.subr.mxu0 0.0
  %216 = vmatpush1.msra.mxu0 0.0
  %217 = vmatprep.subr.mxu0 0.0
  %218 = vmatpush1.msra.mxu0 0.0
  %219 = vmatprep.subr.mxu0 0.0
  %220 = vmatpush1.msra.mxu0 0.0
  %221 = vmatprep.subr.mxu0 0.0
  %222 = vmatpush1.msra.mxu0 0.0
  %223 = vmatprep.subr.mxu0 0.0
  %224 = vmatpush1.msra.mxu0 0.0
  %225 = vmatprep.subr.mxu0 0.0
  %226 = vmatpush1.msra.mxu0 0.0
  %227 = vmatprep.subr.mxu0 0.0
  %228 = vmatpush1.msra.mxu0 0.0
  %229 = vmatprep.subr.mxu0 0.0
  %230 = vmatpush1.msra.mxu0 0.0
  %231 = vmatprep.mubr.f32.mxu0 0.0
  %232 = vmatmul.mubr.f32.gmra.mrb[0].mxu0 %v56
  %v233 = vpop.f32.mrb[0].mxu0
  %v234 = vadd.f32 0.0, %v233
  %v235 = vpop.f32.mrb[0].mxu0
  %236 = vmatprep.mubr.f32.mxu0 0.0
  %237 = vmatmul.mubr.f32.gmra.mrb[0].mxu0 %v59
  %v238 = vpop.f32.mrb[0].mxu0
  %v239 = vadd.f32 0.0, %v238
  %v240 = vpop.f32.mrb[0].mxu0
  %241 = vmatprep.mubr.f32.mxu0 0.0
  %242 = vmatmul.mubr.f32.gmra.mrb[0].mxu0 %v62
  %v243 = vpop.f32.mrb[0].mxu0
  %v244 = vadd.f32 0.0, %v243
  %v245 = vpop.f32.mrb[0].mxu0
  %246 = vmatprep.mubr.f32.mxu0 0.0
  %247 = vmatmul.mubr.f32.gmra.mrb[0].mxu0 %v65
  %v248 = vpop.f32.mrb[0].mxu0
  %v249 = vadd.f32 0.0, %v248
  %v250 = vpop.f32.mrb[0].mxu0
  %251 = vmatprep.mubr.f32.mxu0 0.0
  %252 = vmatmul.mubr.f32.gmra.mrb[0].mxu0 %v68
  %v253 = vpop.f32.mrb[0].mxu0
  %v254 = vadd.f32 0.0, %v253
  %v255 = vpop.f32.mrb[0].mxu0
  %256 = vmatprep.mubr.f32.mxu0 0.0
  %257 = vmatmul.mubr.f32.gmra.mrb[0].mxu0 %v71
  %v258 = vpop.f32.mrb[0].mxu0
  %v259 = vadd.f32 0.0, %v258
  %v260 = vpop.f32.mrb[0].mxu0
  %261 = vmatprep.mubr.f32.mxu0 0.0
  %262 = vmatmul.mubr.f32.gmra.mrb[0].mxu0 %v74
  %v263 = vpop.f32.mrb[0].mxu0
  %v264 = vadd.f32 0.0, %v263
  %v265 = vpop.f32.mrb[0].mxu0
  %266 = vmatprep.mubr.f32.mxu0 0.0
  %267 = vmatmul.mubr.f32.gmra.mrb[0].mxu0 %v77
  %v268 = vpop.f32.mrb[0].mxu0
  %v269 = vadd.f32 0.0, %v268
  %v270 = vpop.f32.mrb[0].mxu0
  %271 = vmatprep.mubr.f32.mxu0 0.0
  %272 = vmatmul.mubr.f32.gmra.mrb[0].mxu0 %v80
  %v273 = vpop.f32.mrb[0].mxu0
  %v274 = vadd.f32 0.0, %v273
  %v275 = vpop.f32.mrb[0].mxu0
  %276 = vmatprep.mubr.f32.mxu0 0.0
  %277 = vmatmul.mubr.f32.gmra.mrb[0].mxu0 %v83
  %v278 = vpop.f32.mrb[0].mxu0
  %v279 = vadd.f32 0.0, %v278
  %v280 = vpop.f32.mrb[0].mxu0
  %281 = vmatprep.mubr.f32.mxu0 0.0
  %282 = vmatmul.mubr.f32.gmra.mrb[0].mxu0 %v86
  %v283 = vpop.f32.mrb[0].mxu0
  %v284 = vadd.f32 0.0, %v283
  %v285 = vpop.f32.mrb[0].mxu0
  %286 = vmatprep.mubr.f32.mxu0 0.0
  %287 = vmatmul.mubr.f32.gmra.mrb[0].mxu0 %v89
  %v288 = vpop.f32.mrb[0].mxu0
  %v289 = vadd.f32 0.0, %v288
  %v290 = vpop.f32.mrb[0].mxu0
  %291 = vmatprep.mubr.f32.mxu0 0.0
  %292 = vmatmul.mubr.f32.gmra.mrb[0].mxu0 %v92
  %v293 = vpop.f32.mrb[0].mxu0
  %v294 = vadd.f32 0.0, %v293
  %v295 = vpop.f32.mrb[0].mxu0
  %296 = vmatprep.mubr.f32.mxu0 0.0
  %297 = vmatmul.mubr.f32.gmra.mrb[0].mxu0 %v95
  %v298 = vpop.f32.mrb[0].mxu0
  %v299 = vadd.f32 0.0, %v298
  %v300 = vpop.f32.mrb[0].mxu0
  %301 = vmatprep.mubr.f32.mxu0 0.0
  %302 = vmatmul.mubr.f32.gmra.mrb[0].mxu0 %v98
  %v303 = vpop.f32.mrb[0].mxu0
  %v304 = vadd.f32 0.0, %v303
  %v305 = vpop.f32.mrb[0].mxu0
  %306 = vmatprep.mubr.f32.mxu0 0.0
  %307 = vmatmul.mubr.f32.gmra.mrb[0].mxu0 %v101
  %v308 = vpop.f32.mrb[0].mxu0
  %v309 = vadd.f32 0.0, %v308
  %v310 = vpop.f32.mrb[0].mxu0
  %311 = vmatprep.mubr.f32.mxu0 0.0
  %312 = vmatmul.mubr.f32.gmra.mrb[0].mxu0 %v104
  %v313 = vpop.f32.mrb[0].mxu0
  %v314 = vadd.f32 0.0, %v313
  %v315 = vpop.f32.mrb[0].mxu0
  %316 = vmatprep.mubr.f32.mxu0 0.0
  %317 = vmatmul.mubr.f32.gmra.mrb[0].mxu0 %v107
  %v318 = vpop.f32.mrb[0].mxu0
  %v319 = vadd.f32 0.0, %v318
  %v320 = vpop.f32.mrb[0].mxu0
  %321 = vmatprep.mubr.f32.mxu0 0.0
  %322 = vmatmul.mubr.f32.gmra.mrb[0].mxu0 %v110
  %v323 = vpop.f32.mrb[0].mxu0
  %v324 = vadd.f32 0.0, %v323
  %v325 = vpop.f32.mrb[0].mxu0
  %326 = vmatprep.mubr.f32.mxu0 0.0
  %327 = vmatmul.mubr.f32.gmra.mrb[0].mxu0 %v113
  %v328 = vpop.f32.mrb[0].mxu0
  %v329 = vadd.f32 0.0, %v328
  %v330 = vpop.f32.mrb[0].mxu0
  %331 = vmatprep.mubr.f32.mxu0 0.0
  %332 = vmatmul.mubr.f32.gmra.mrb[0].mxu0 %v116
  %v333 = vpop.f32.mrb[0].mxu0
  %v334 = vadd.f32 0.0, %v333
  %v335 = vpop.f32.mrb[0].mxu0
  %336 = vmatprep.mubr.f32.mxu0 0.0
  %337 = vmatmul.mubr.f32.gmra.mrb[0].mxu0 %v119
  %v338 = vpop.f32.mrb[0].mxu0
  %v339 = vadd.f32 0.0, %v338
  %v340 = vpop.f32.mrb[0].mxu0
  %341 = vmatprep.mubr.f32.mxu0 0.0
  %342 = vmatmul.mubr.f32.gmra.mrb[0].mxu0 %v122
  %v343 = vpop.f32.mrb[0].mxu0
  %v344 = vadd.f32 0.0, %v343
  %v345 = vpop.f32.mrb[0].mxu0
  %346 = vmatprep.mubr.f32.mxu0 0.0
  %347 = vmatmul.mubr.f32.gmra.mrb[0].mxu0 %v125
  %v348 = vpop.f32.mrb[0].mxu0
  %v349 = vadd.f32 0.0, %v348
  %v350 = vpop.f32.mrb[0].mxu0
  %351 = vmatprep.mubr.f32.mxu0 0.0
  %352 = vmatmul.mubr.f32.gmra.mrb[0].mxu0 %v128
  %v353 = vpop.f32.mrb[0].mxu0
  %v354 = vadd.f32 0.0, %v353
  %v355 = vpop.f32.mrb[0].mxu0
  %356 = vmatprep.mubr.f32.mxu0 0.0
  %357 = vmatmul.mubr.f32.gmra.mrb[0].mxu0 %v131
  %v358 = vpop.f32.mrb[0].mxu0
  %v359 = vadd.f32 0.0, %v358
  %v360 = vpop.f32.mrb[0].mxu0
  %361 = vmatprep.mubr.f32.mxu0 0.0
  %362 = vmatmul.mubr.f32.gmra.mrb[0].mxu0 %v134
  %v363 = vpop.f32.mrb[0].mxu0
  %v364 = vadd.f32 0.0, %v363
  %v365 = vpop.f32.mrb[0].mxu0
  %366 = vmatprep.mubr.f32.mxu0 0.0
  %367 = vmatmul.mubr.f32.gmra.mrb[0].mxu0 %v137
  %v368 = vpop.f32.mrb[0].mxu0
  %v369 = vadd.f32 0.0, %v368
  %v370 = vpop.f32.mrb[0].mxu0
  %371 = vmatprep.mubr.f32.mxu0 0.0
  %372 = vmatmul.mubr.f32.gmra.mrb[0].mxu0 %v140
  %v373 = vpop.f32.mrb[0].mxu0
  %v374 = vadd.f32 0.0, %v373
  %v375 = vpop.f32.mrb[0].mxu0
  %376 = vmatprep.mubr.f32.mxu0 0.0
  %377 = vmatmul.mubr.f32.gmra.mrb[0].mxu0 %v143
  %v378 = vpop.f32.mrb[0].mxu0
  %v379 = vadd.f32 0.0, %v378
  %v380 = vpop.f32.mrb[0].mxu0
  %381 = vmatprep.mubr.f32.mxu0 0.0
  %382 = vmatmul.mubr.f32.gmra.mrb[0].mxu0 %v146
  %v383 = vpop.f32.mrb[0].mxu0
  %v384 = vadd.f32 0.0, %v383
  %v385 = vpop.f32.mrb[0].mxu0
  %386 = vmatprep.mubr.f32.mxu0 0.0
  %387 = vmatmul.mubr.f32.gmra.mrb[0].mxu0 %v149
  %v388 = vpop.f32.mrb[0].mxu0
  %v389 = vadd.f32 0.0, %v388
  %v390 = vpop.f32.mrb[0].mxu0
  %391 = vmatprep.mubr.f32.mxu0 0.0
  %392 = vmatmul.mubr.f32.gmra.mrb[0].mxu0 %v152
  %v393 = vpop.f32.mrb[0].mxu0
  %v394 = vadd.f32 0.0, %v393
  %v395 = vpop.f32.mrb[0].mxu0
  %396 = vmatprep.mubr.f32.mxu0 0.0
  %397 = vmatmul.mubr.f32.gmra.mrb[0].mxu0 %v155
  %v398 = vpop.f32.mrb[0].mxu0
  %v399 = vadd.f32 0.0, %v398
  %v400 = vpop.f32.mrb[0].mxu0
  %401 = vmatprep.mubr.f32.mxu0 0.0
  %402 = vmatmul.mubr.f32.gmra.mrb[0].mxu0 %v158
  %v403 = vpop.f32.mrb[0].mxu0
  %v404 = vadd.f32 0.0, %v403
  %v405 = vpop.f32.mrb[0].mxu0
  %406 = vmatprep.mubr.f32.mxu0 0.0
  %407 = vmatmul.mubr.f32.gmra.mrb[0].mxu0 %v161
  %v408 = vpop.f32.mrb[0].mxu0
  %v409 = vadd.f32 0.0, %v408
  %v410 = vpop.f32.mrb[0].mxu0
  %411 = vdwg.mxu0
  %s412 = scalar_lea.vmem %s0, 288
  %v413 = vld [vmem:[%s412] sm:$0xff]
  %v414 = vld [vmem:[%s412 + $0x8] sm:$0xff]
  %v415 = vld [vmem:[%s412 + $0x10] sm:$0xff]
  %v416 = vld [vmem:[%s412 + $0x18] sm:$0xff]
  %v417 = vld [vmem:[%s412 + $0x20] sm:$0xff]
  %v418 = vld [vmem:[%s412 + $0x28] sm:$0xff]
  %v419 = vld [vmem:[%s412 + $0x30] sm:$0xff]
  %v420 = vld [vmem:[%s412 + $0x38] sm:$0xff]
  %v421 = vld [vmem:[%s412 + $0x40] sm:$0xff]
  %v422 = vld [vmem:[%s412 + $0x48] sm:$0xff]
  %v423 = vld [vmem:[%s412 + $0x50] sm:$0xff]
  %v424 = vld [vmem:[%s412 + $0x58] sm:$0xff]
  %v425 = vld [vmem:[%s412 + $0x60] sm:$0xff]
  %v426 = vld [vmem:[%s412 + $0x68] sm:$0xff]
  %v427 = vld [vmem:[%s412 + $0x70] sm:$0xff]
  %v428 = vld [vmem:[%s412 + $0x78] sm:$0xff]
  %v429 = vld [vmem:[%s412 + $0x80] sm:$0xff]
  %v430 = vld [vmem:[%s412 + $0x88] sm:$0xff]
  %v431 = vld [vmem:[%s412 + $0x90] sm:$0xff]
  %v432 = vld [vmem:[%s412 + $0x98] sm:$0xff]
  %v433 = vld [vmem:[%s412 + $0xa0] sm:$0xff]
  %v434 = vld [vmem:[%s412 + $0xa8] sm:$0xff]
  %v435 = vld [vmem:[%s412 + $0xb0] sm:$0xff]
  %v436 = vld [vmem:[%s412 + $0xb8] sm:$0xff]
  %v437 = vld [vmem:[%s412 + $0xc0] sm:$0xff]
  %v438 = vld [vmem:[%s412 + $0xc8] sm:$0xff]
  %v439 = vld [vmem:[%s412 + $0xd0] sm:$0xff]
  %v440 = vld [vmem:[%s412 + $0xd8] sm:$0xff]
  %v441 = vld [vmem:[%s412 + $0xe0] sm:$0xff]
  %v442 = vld [vmem:[%s412 + $0xe8] sm:$0xff]
  %v443 = vld [vmem:[%s412 + $0xf0] sm:$0xff]
  %v444 = vld [vmem:[%s412 + $0xf8] sm:$0xff]
  %v445 = vld [vmem:[%s412 + $0x100] sm:$0xff]
  %v446 = vld [vmem:[%s412 + $0x108] sm:$0xff]
  %v447 = vld [vmem:[%s412 + $0x110] sm:$0xff]
  %v448 = vld [vmem:[%s412 + $0x118] sm:$0xff]
  %v450 = vsel %vm54, %v413, 0
  %v453 = vsel %vm54, %v414, 0
  %v456 = vsel %vm54, %v415, 0
  %v459 = vsel %vm54, %v416, 0
  %v462 = vsel %vm54, %v417, 0
  %v465 = vsel %vm54, %v418, 0
  %v468 = vsel %vm54, %v419, 0
  %v471 = vsel %vm54, %v420, 0
  %v474 = vsel %vm54, %v421, 0
  %v477 = vsel %vm54, %v422, 0
  %v480 = vsel %vm54, %v423, 0
  %v483 = vsel %vm54, %v424, 0
  %v486 = vsel %vm54, %v425, 0
  %v489 = vsel %vm54, %v426, 0
  %v492 = vsel %vm54, %v427, 0
  %v495 = vsel %vm54, %v428, 0
  %v498 = vsel %vm54, %v429, 0
  %v501 = vsel %vm54, %v430, 0
  %v504 = vsel %vm54, %v431, 0
  %v507 = vsel %vm54, %v432, 0
  %v510 = vsel %vm54, %v433, 0
  %v513 = vsel %vm54, %v434, 0
  %v516 = vsel %vm54, %v435, 0
  %v519 = vsel %vm54, %v436, 0
  %v522 = vsel %vm54, %v437, 0
  %v525 = vsel %vm54, %v438, 0
  %v528 = vsel %vm54, %v439, 0
  %v531 = vsel %vm54, %v440, 0
  %v534 = vsel %vm54, %v441, 0
  %v537 = vsel %vm54, %v442, 0
  %v540 = vsel %vm54, %v443, 0
  %v543 = vsel %vm54, %v444, 0
  %v546 = vsel %vm54, %v445, 0
  %v549 = vsel %vm54, %v446, 0
  %v552 = vsel %vm54, %v447, 0
  %v555 = vsel %vm54, %v448, 0
  %557 = vmatprep.subr.mxu0 0.0
  %558 = vmatpush1.msra.mxu0 %v14
  %559 = vmatprep.subr.mxu0 0.0
  %560 = vmatpush1.msra.mxu0 %v15
  %561 = vmatprep.subr.mxu0 0.0
  %562 = vmatpush1.msra.mxu0 %v16
  %563 = vmatprep.subr.mxu0 0.0
  %564 = vmatpush1.msra.mxu0 %v165
  %565 = vmatprep.subr.mxu0 0.0
  %566 = vmatpush1.msra.mxu0 0.0
  %567 = vmatprep.subr.mxu0 0.0
  %568 = vmatpush1.msra.mxu0 0.0
  %569 = vmatprep.subr.mxu0 0.0
  %570 = vmatpush1.msra.mxu0 0.0
  %571 = vmatprep.subr.mxu0 0.0
  %572 = vmatpush1.msra.mxu0 0.0
  %573 = vmatprep.subr.mxu0 0.0
  %574 = vmatpush1.msra.mxu0 0.0
  %575 = vmatprep.subr.mxu0 0.0
  %576 = vmatpush1.msra.mxu0 0.0
  %577 = vmatprep.subr.mxu0 0.0
  %578 = vmatpush1.msra.mxu0 0.0
  %579 = vmatprep.subr.mxu0 0.0
  %580 = vmatpush1.msra.mxu0 0.0
  %581 = vmatprep.subr.mxu0 0.0
  %582 = vmatpush1.msra.mxu0 0.0
  %583 = vmatprep.subr.mxu0 0.0
  %584 = vmatpush1.msra.mxu0 0.0
  %585 = vmatprep.subr.mxu0 0.0
  %586 = vmatpush1.msra.mxu0 0.0
  %587 = vmatprep.subr.mxu0 0.0
  %588 = vmatpush1.msra.mxu0 0.0
  %589 = vmatprep.subr.mxu0 0.0
  %590 = vmatpush1.msra.mxu0 0.0
  %591 = vmatprep.subr.mxu0 0.0
  %592 = vmatpush1.msra.mxu0 0.0
  %593 = vmatprep.subr.mxu0 0.0
  %594 = vmatpush1.msra.mxu0 0.0
  %595 = vmatprep.subr.mxu0 0.0
  %596 = vmatpush1.msra.mxu0 0.0
  %597 = vmatprep.subr.mxu0 0.0
  %598 = vmatpush1.msra.mxu0 0.0
  %599 = vmatprep.subr.mxu0 0.0
  %600 = vmatpush1.msra.mxu0 0.0
  %601 = vmatprep.subr.mxu0 0.0
  %602 = vmatpush1.msra.mxu0 0.0
  %603 = vmatprep.subr.mxu0 0.0
  %604 = vmatpush1.msra.mxu0 0.0
  %605 = vmatprep.subr.mxu0 0.0
  %606 = vmatpush1.msra.mxu0 0.0
  %607 = vmatprep.subr.mxu0 0.0
  %608 = vmatpush1.msra.mxu0 0.0
  %609 = vmatprep.subr.mxu0 0.0
  %610 = vmatpush1.msra.mxu0 0.0
  %611 = vmatprep.subr.mxu0 0.0
  %612 = vmatpush1.msra.mxu0 0.0
  %613 = vmatprep.subr.mxu0 0.0
  %614 = vmatpush1.msra.mxu0 0.0
  %615 = vmatprep.subr.mxu0 0.0
  %616 = vmatpush1.msra.mxu0 0.0
  %617 = vmatprep.subr.mxu0 0.0
  %618 = vmatpush1.msra.mxu0 0.0
  %619 = vmatprep.subr.mxu0 0.0
  %620 = vmatpush1.msra.mxu0 0.0
  %621 = vmatprep.mubr.f32.mxu0 0.0
  %622 = vmatmul.mubr.f32.gmra.mrb[0].mxu0 %v450
  %v623 = vpop.f32.mrb[0].mxu0
  %v624 = vadd.f32 0.0, %v623
  %v625 = vpop.f32.mrb[0].mxu0
  %626 = vmatprep.mubr.f32.mxu0 0.0
  %627 = vmatmul.mubr.f32.gmra.mrb[0].mxu0 %v453
  %v628 = vpop.f32.mrb[0].mxu0
  %v629 = vadd.f32 0.0, %v628
  %v630 = vpop.f32.mrb[0].mxu0
  %631 = vmatprep.mubr.f32.mxu0 0.0
  %632 = vmatmul.mubr.f32.gmra.mrb[0].mxu0 %v456
  %v633 = vpop.f32.mrb[0].mxu0
  %v634 = vadd.f32 0.0, %v633
  %v635 = vpop.f32.mrb[0].mxu0
  %636 = vmatprep.mubr.f32.mxu0 0.0
  %637 = vmatmul.mubr.f32.gmra.mrb[0].mxu0 %v459
  %v638 = vpop.f32.mrb[0].mxu0
  %v639 = vadd.f32 0.0, %v638
  %v640 = vpop.f32.mrb[0].mxu0
  %641 = vmatprep.mubr.f32.mxu0 0.0
  %642 = vmatmul.mubr.f32.gmra.mrb[0].mxu0 %v462
  %v643 = vpop.f32.mrb[0].mxu0
  %v644 = vadd.f32 0.0, %v643
  %v645 = vpop.f32.mrb[0].mxu0
  %646 = vmatprep.mubr.f32.mxu0 0.0
  %647 = vmatmul.mubr.f32.gmra.mrb[0].mxu0 %v465
  %v648 = vpop.f32.mrb[0].mxu0
  %v649 = vadd.f32 0.0, %v648
  %v650 = vpop.f32.mrb[0].mxu0
  %651 = vmatprep.mubr.f32.mxu0 0.0
  %652 = vmatmul.mubr.f32.gmra.mrb[0].mxu0 %v468
  %v653 = vpop.f32.mrb[0].mxu0
  %v654 = vadd.f32 0.0, %v653
  %v655 = vpop.f32.mrb[0].mxu0
  %656 = vmatprep.mubr.f32.mxu0 0.0
  %657 = vmatmul.mubr.f32.gmra.mrb[0].mxu0 %v471
  %v658 = vpop.f32.mrb[0].mxu0
  %v659 = vadd.f32 0.0, %v658
  %v660 = vpop.f32.mrb[0].mxu0
  %661 = vmatprep.mubr.f32.mxu0 0.0
  %662 = vmatmul.mubr.f32.gmra.mrb[0].mxu0 %v474
  %v663 = vpop.f32.mrb[0].mxu0
  %v664 = vadd.f32 0.0, %v663
  %v665 = vpop.f32.mrb[0].mxu0
  %666 = vmatprep.mubr.f32.mxu0 0.0
  %667 = vmatmul.mubr.f32.gmra.mrb[0].mxu0 %v477
  %v668 = vpop.f32.mrb[0].mxu0
  %v669 = vadd.f32 0.0, %v668
  %v670 = vpop.f32.mrb[0].mxu0
  %671 = vmatprep.mubr.f32.mxu0 0.0
  %672 = vmatmul.mubr.f32.gmra.mrb[0].mxu0 %v480
  %v673 = vpop.f32.mrb[0].mxu0
  %v674 = vadd.f32 0.0, %v673
  %v675 = vpop.f32.mrb[0].mxu0
  %676 = vmatprep.mubr.f32.mxu0 0.0
  %677 = vmatmul.mubr.f32.gmra.mrb[0].mxu0 %v483
  %v678 = vpop.f32.mrb[0].mxu0
  %v679 = vadd.f32 0.0, %v678
  %v680 = vpop.f32.mrb[0].mxu0
  %681 = vmatprep.mubr.f32.mxu0 0.0
  %682 = vmatmul.mubr.f32.gmra.mrb[0].mxu0 %v486
  %v683 = vpop.f32.mrb[0].mxu0
  %v684 = vadd.f32 0.0, %v683
  %v685 = vpop.f32.mrb[0].mxu0
  %686 = vmatprep.mubr.f32.mxu0 0.0
  %687 = vmatmul.mubr.f32.gmra.mrb[0].mxu0 %v489
  %v688 = vpop.f32.mrb[0].mxu0
  %v689 = vadd.f32 0.0, %v688
  %v690 = vpop.f32.mrb[0].mxu0
  %691 = vmatprep.mubr.f32.mxu0 0.0
  %692 = vmatmul.mubr.f32.gmra.mrb[0].mxu0 %v492
  %v693 = vpop.f32.mrb[0].mxu0
  %v694 = vadd.f32 0.0, %v693
  %v695 = vpop.f32.mrb[0].mxu0
  %696 = vmatprep.mubr.f32.mxu0 0.0
  %697 = vmatmul.mubr.f32.gmra.mrb[0].mxu0 %v495
  %v698 = vpop.f32.mrb[0].mxu0
  %v699 = vadd.f32 0.0, %v698
  %v700 = vpop.f32.mrb[0].mxu0
  %701 = vmatprep.mubr.f32.mxu0 0.0
  %702 = vmatmul.mubr.f32.gmra.mrb[0].mxu0 %v498
  %v703 = vpop.f32.mrb[0].mxu0
  %v704 = vadd.f32 0.0, %v703
  %v705 = vpop.f32.mrb[0].mxu0
  %706 = vmatprep.mubr.f32.mxu0 0.0
  %707 = vmatmul.mubr.f32.gmra.mrb[0].mxu0 %v501
  %v708 = vpop.f32.mrb[0].mxu0
  %v709 = vadd.f32 0.0, %v708
  %v710 = vpop.f32.mrb[0].mxu0
  %711 = vmatprep.mubr.f32.mxu0 0.0
  %712 = vmatmul.mubr.f32.gmra.mrb[0].mxu0 %v504
  %v713 = vpop.f32.mrb[0].mxu0
  %v714 = vadd.f32 0.0, %v713
  %v715 = vpop.f32.mrb[0].mxu0
  %716 = vmatprep.mubr.f32.mxu0 0.0
  %717 = vmatmul.mubr.f32.gmra.mrb[0].mxu0 %v507
  %v718 = vpop.f32.mrb[0].mxu0
  %v719 = vadd.f32 0.0, %v718
  %v720 = vpop.f32.mrb[0].mxu0
  %721 = vmatprep.mubr.f32.mxu0 0.0
  %722 = vmatmul.mubr.f32.gmra.mrb[0].mxu0 %v510
  %v723 = vpop.f32.mrb[0].mxu0
  %v724 = vadd.f32 0.0, %v723
  %v725 = vpop.f32.mrb[0].mxu0
  %726 = vmatprep.mubr.f32.mxu0 0.0
  %727 = vmatmul.mubr.f32.gmra.mrb[0].mxu0 %v513
  %v728 = vpop.f32.mrb[0].mxu0
  %v729 = vadd.f32 0.0, %v728
  %v730 = vpop.f32.mrb[0].mxu0
  %731 = vmatprep.mubr.f32.mxu0 0.0
  %732 = vmatmul.mubr.f32.gmra.mrb[0].mxu0 %v516
  %v733 = vpop.f32.mrb[0].mxu0
  %v734 = vadd.f32 0.0, %v733
  %v735 = vpop.f32.mrb[0].mxu0
  %736 = vmatprep.mubr.f32.mxu0 0.0
  %737 = vmatmul.mubr.f32.gmra.mrb[0].mxu0 %v519
  %v738 = vpop.f32.mrb[0].mxu0
  %v739 = vadd.f32 0.0, %v738
  %v740 = vpop.f32.mrb[0].mxu0
  %741 = vmatprep.mubr.f32.mxu0 0.0
  %742 = vmatmul.mubr.f32.gmra.mrb[0].mxu0 %v522
  %v743 = vpop.f32.mrb[0].mxu0
  %v744 = vadd.f32 0.0, %v743
  %v745 = vpop.f32.mrb[0].mxu0
  %746 = vmatprep.mubr.f32.mxu0 0.0
  %747 = vmatmul.mubr.f32.gmra.mrb[0].mxu0 %v525
  %v748 = vpop.f32.mrb[0].mxu0
  %v749 = vadd.f32 0.0, %v748
  %v750 = vpop.f32.mrb[0].mxu0
  %751 = vmatprep.mubr.f32.mxu0 0.0
  %752 = vmatmul.mubr.f32.gmra.mrb[0].mxu0 %v528
  %v753 = vpop.f32.mrb[0].mxu0
  %v754 = vadd.f32 0.0, %v753
  %v755 = vpop.f32.mrb[0].mxu0
  %756 = vmatprep.mubr.f32.mxu0 0.0
  %757 = vmatmul.mubr.f32.gmra.mrb[0].mxu0 %v531
  %v758 = vpop.f32.mrb[0].mxu0
  %v759 = vadd.f32 0.0, %v758
  %v760 = vpop.f32.mrb[0].mxu0
  %761 = vmatprep.mubr.f32.mxu0 0.0
  %762 = vmatmul.mubr.f32.gmra.mrb[0].mxu0 %v534
  %v763 = vpop.f32.mrb[0].mxu0
  %v764 = vadd.f32 0.0, %v763
  %v765 = vpop.f32.mrb[0].mxu0
  %766 = vmatprep.mubr.f32.mxu0 0.0
  %767 = vmatmul.mubr.f32.gmra.mrb[0].mxu0 %v537
  %v768 = vpop.f32.mrb[0].mxu0
  %v769 = vadd.f32 0.0, %v768
  %v770 = vpop.f32.mrb[0].mxu0
  %771 = vmatprep.mubr.f32.mxu0 0.0
  %772 = vmatmul.mubr.f32.gmra.mrb[0].mxu0 %v540
  %v773 = vpop.f32.mrb[0].mxu0
  %v774 = vadd.f32 0.0, %v773
  %v775 = vpop.f32.mrb[0].mxu0
  %776 = vmatprep.mubr.f32.mxu0 0.0
  %777 = vmatmul.mubr.f32.gmra.mrb[0].mxu0 %v543
  %v778 = vpop.f32.mrb[0].mxu0
  %v779 = vadd.f32 0.0, %v778
  %v780 = vpop.f32.mrb[0].mxu0
  %781 = vmatprep.mubr.f32.mxu0 0.0
  %782 = vmatmul.mubr.f32.gmra.mrb[0].mxu0 %v546
  %v783 = vpop.f32.mrb[0].mxu0
  %v784 = vadd.f32 0.0, %v783
  %v785 = vpop.f32.mrb[0].mxu0
  %786 = vmatprep.mubr.f32.mxu0 0.0
  %787 = vmatmul.mubr.f32.gmra.mrb[0].mxu0 %v549
  %v788 = vpop.f32.mrb[0].mxu0
  %v789 = vadd.f32 0.0, %v788
  %v790 = vpop.f32.mrb[0].mxu0
  %791 = vmatprep.mubr.f32.mxu0 0.0
  %792 = vmatmul.mubr.f32.gmra.mrb[0].mxu0 %v552
  %v793 = vpop.f32.mrb[0].mxu0
  %v794 = vadd.f32 0.0, %v793
  %v795 = vpop.f32.mrb[0].mxu0
  %796 = vmatprep.mubr.f32.mxu0 0.0
  %797 = vmatmul.mubr.f32.gmra.mrb[0].mxu0 %v555
  %v798 = vpop.f32.mrb[0].mxu0
  %v799 = vadd.f32 0.0, %v798
  %v800 = vpop.f32.mrb[0].mxu0
  %801 = vdwg.mxu0
  %v802 = vmax.f32 %v234, %v624
  %v803 = vmax.f32 %v239, %v629
  %v804 = vmax.f32 %v244, %v634
  %v805 = vmax.f32 %v249, %v639
  %v806 = vmax.f32 %v254, %v644
  %v807 = vmax.f32 %v259, %v649
  %v808 = vmax.f32 %v264, %v654
  %v809 = vmax.f32 %v269, %v659
  %v810 = vmax.f32 %v274, %v664
  %v811 = vmax.f32 %v279, %v669
  %v812 = vmax.f32 %v284, %v674
  %v813 = vmax.f32 %v289, %v679
  %v814 = vmax.f32 %v294, %v684
  %v815 = vmax.f32 %v299, %v689
  %v816 = vmax.f32 %v304, %v694
  %v817 = vmax.f32 %v309, %v699
  %v818 = vmax.f32 %v314, %v704
  %v819 = vmax.f32 %v319, %v709
  %v820 = vmax.f32 %v324, %v714
  %v821 = vmax.f32 %v329, %v719
  %v822 = vmax.f32 %v334, %v724
  %v823 = vmax.f32 %v339, %v729
  %v824 = vmax.f32 %v344, %v734
  %v825 = vmax.f32 %v349, %v739
  %v826 = vmax.f32 %v354, %v744
  %v827 = vmax.f32 %v359, %v749
  %v828 = vmax.f32 %v364, %v754
  %v829 = vmax.f32 %v369, %v759
  %v830 = vmax.f32 %v374, %v764
  %v831 = vmax.f32 %v379, %v769
  %v832 = vmax.f32 %v384, %v774
  %v833 = vmax.f32 %v389, %v779
  %v834 = vmax.f32 %v394, %v784
  %v835 = vmax.f32 %v399, %v789
  %v836 = vmax.f32 %v404, %v794
  %v837 = vmax.f32 %v409, %v799
  %s838 = scalar_lea.vmem %s0, 576
  %v839 = vld [vmem:[%s838] sm:$0xff]
  %v840 = vld [vmem:[%s838 + $0x8] sm:$0xff]
  %v841 = vld [vmem:[%s838 + $0x10] sm:$0xff]
  %v842 = vld [vmem:[%s838 + $0x18] sm:$0xff]
  %v843 = vld [vmem:[%s838 + $0x20] sm:$0xff]
  %v844 = vld [vmem:[%s838 + $0x28] sm:$0xff]
  %v845 = vld [vmem:[%s838 + $0x30] sm:$0xff]
  %v846 = vld [vmem:[%s838 + $0x38] sm:$0xff]
  %v847 = vld [vmem:[%s838 + $0x40] sm:$0xff]
  %v848 = vld [vmem:[%s838 + $0x48] sm:$0xff]
  %v849 = vld [vmem:[%s838 + $0x50] sm:$0xff]
  %v850 = vld [vmem:[%s838 + $0x58] sm:$0xff]
  %v851 = vld [vmem:[%s838 + $0x60] sm:$0xff]
  %v852 = vld [vmem:[%s838 + $0x68] sm:$0xff]
  %v853 = vld [vmem:[%s838 + $0x70] sm:$0xff]
  %v854 = vld [vmem:[%s838 + $0x78] sm:$0xff]
  %v855 = vld [vmem:[%s838 + $0x80] sm:$0xff]
  %v856 = vld [vmem:[%s838 + $0x88] sm:$0xff]
  %v857 = vld [vmem:[%s838 + $0x90] sm:$0xff]
  %v858 = vld [vmem:[%s838 + $0x98] sm:$0xff]
  %v859 = vld [vmem:[%s838 + $0xa0] sm:$0xff]
  %v860 = vld [vmem:[%s838 + $0xa8] sm:$0xff]
  %v861 = vld [vmem:[%s838 + $0xb0] sm:$0xff]
  %v862 = vld [vmem:[%s838 + $0xb8] sm:$0xff]
  %v863 = vld [vmem:[%s838 + $0xc0] sm:$0xff]
  %v864 = vld [vmem:[%s838 + $0xc8] sm:$0xff]
  %v865 = vld [vmem:[%s838 + $0xd0] sm:$0xff]
  %v866 = vld [vmem:[%s838 + $0xd8] sm:$0xff]
  %v867 = vld [vmem:[%s838 + $0xe0] sm:$0xff]
  %v868 = vld [vmem:[%s838 + $0xe8] sm:$0xff]
  %v869 = vld [vmem:[%s838 + $0xf0] sm:$0xff]
  %v870 = vld [vmem:[%s838 + $0xf8] sm:$0xff]
  %v871 = vld [vmem:[%s838 + $0x100] sm:$0xff]
  %v872 = vld [vmem:[%s838 + $0x108] sm:$0xff]
  %v873 = vld [vmem:[%s838 + $0x110] sm:$0xff]
  %v874 = vld [vmem:[%s838 + $0x118] sm:$0xff]
  %v876 = vsel %vm54, %v839, 0
  %v879 = vsel %vm54, %v840, 0
  %v882 = vsel %vm54, %v841, 0
  %v885 = vsel %vm54, %v842, 0
  %v888 = vsel %vm54, %v843, 0
  %v891 = vsel %vm54, %v844, 0
  %v894 = vsel %vm54, %v845, 0
  %v897 = vsel %vm54, %v846, 0
  %v900 = vsel %vm54, %v847, 0
  %v903 = vsel %vm54, %v848, 0
  %v906 = vsel %vm54, %v849, 0
  %v909 = vsel %vm54, %v850, 0
  %v912 = vsel %vm54, %v851, 0
  %v915 = vsel %vm54, %v852, 0
  %v918 = vsel %vm54, %v853, 0
  %v921 = vsel %vm54, %v854, 0
  %v924 = vsel %vm54, %v855, 0
  %v927 = vsel %vm54, %v856, 0
  %v930 = vsel %vm54, %v857, 0
  %v933 = vsel %vm54, %v858, 0
  %v936 = vsel %vm54, %v859, 0
  %v939 = vsel %vm54, %v860, 0
  %v942 = vsel %vm54, %v861, 0
  %v945 = vsel %vm54, %v862, 0
  %v948 = vsel %vm54, %v863, 0
  %v951 = vsel %vm54, %v864, 0
  %v954 = vsel %vm54, %v865, 0
  %v957 = vsel %vm54, %v866, 0
  %v960 = vsel %vm54, %v867, 0
  %v963 = vsel %vm54, %v868, 0
  %v966 = vsel %vm54, %v869, 0
  %v969 = vsel %vm54, %v870, 0
  %v972 = vsel %vm54, %v871, 0
  %v975 = vsel %vm54, %v872, 0
  %v978 = vsel %vm54, %v873, 0
  %v981 = vsel %vm54, %v874, 0
  %983 = vmatprep.subr.mxu0 0.0
  %984 = vmatpush1.msra.mxu0 %v14
  %985 = vmatprep.subr.mxu0 0.0
  %986 = vmatpush1.msra.mxu0 %v15
  %987 = vmatprep.subr.mxu0 0.0
  %988 = vmatpush1.msra.mxu0 %v16
  %989 = vmatprep.subr.mxu0 0.0
  %990 = vmatpush1.msra.mxu0 %v165
  %991 = vmatprep.subr.mxu0 0.0
  %992 = vmatpush1.msra.mxu0 0.0
  %993 = vmatprep.subr.mxu0 0.0
  %994 = vmatpush1.msra.mxu0 0.0
  %995 = vmatprep.subr.mxu0 0.0
  %996 = vmatpush1.msra.mxu0 0.0
  %997 = vmatprep.subr.mxu0 0.0
  %998 = vmatpush1.msra.mxu0 0.0
  %999 = vmatprep.subr.mxu0 0.0
  %1000 = vmatpush1.msra.mxu0 0.0
  %1001 = vmatprep.subr.mxu0 0.0
  %1002 = vmatpush1.msra.mxu0 0.0
  %1003 = vmatprep.subr.mxu0 0.0
  %1004 = vmatpush1.msra.mxu0 0.0
  %1005 = vmatprep.subr.mxu0 0.0
  %1006 = vmatpush1.msra.mxu0 0.0
  %1007 = vmatprep.subr.mxu0 0.0
  %1008 = vmatpush1.msra.mxu0 0.0
  %1009 = vmatprep.subr.mxu0 0.0
  %1010 = vmatpush1.msra.mxu0 0.0
  %1011 = vmatprep.subr.mxu0 0.0
  %1012 = vmatpush1.msra.mxu0 0.0
  %1013 = vmatprep.subr.mxu0 0.0
  %1014 = vmatpush1.msra.mxu0 0.0
  %1015 = vmatprep.subr.mxu0 0.0
  %1016 = vmatpush1.msra.mxu0 0.0
  %1017 = vmatprep.subr.mxu0 0.0
  %1018 = vmatpush1.msra.mxu0 0.0
  %1019 = vmatprep.subr.mxu0 0.0
  %1020 = vmatpush1.msra.mxu0 0.0
  %1021 = vmatprep.subr.mxu0 0.0
  %1022 = vmatpush1.msra.mxu0 0.0
  %1023 = vmatprep.subr.mxu0 0.0
  %1024 = vmatpush1.msra.mxu0 0.0
  %1025 = vmatprep.subr.mxu0 0.0
  %1026 = vmatpush1.msra.mxu0 0.0
  %1027 = vmatprep.subr.mxu0 0.0
  %1028 = vmatpush1.msra.mxu0 0.0
  %1029 = vmatprep.subr.mxu0 0.0
  %1030 = vmatpush1.msra.mxu0 0.0
  %1031 = vmatprep.subr.mxu0 0.0
  %1032 = vmatpush1.msra.mxu0 0.0
  %1033 = vmatprep.subr.mxu0 0.0
  %1034 = vmatpush1.msra.mxu0 0.0
  %1035 = vmatprep.subr.mxu0 0.0
  %1036 = vmatpush1.msra.mxu0 0.0
  %1037 = vmatprep.subr.mxu0 0.0
  %1038 = vmatpush1.msra.mxu0 0.0
  %1039 = vmatprep.subr.mxu0 0.0
  %1040 = vmatpush1.msra.mxu0 0.0
  %1041 = vmatprep.subr.mxu0 0.0
  %1042 = vmatpush1.msra.mxu0 0.0
  %1043 = vmatprep.subr.mxu0 0.0
  %1044 = vmatpush1.msra.mxu0 0.0
  %1045 = vmatprep.subr.mxu0 0.0
  %1046 = vmatpush1.msra.mxu0 0.0
  %1047 = vmatprep.mubr.f32.mxu0 0.0
  %1048 = vmatmul.mubr.f32.gmra.mrb[0].mxu0 %v876
  %v1049 = vpop.f32.mrb[0].mxu0
  %v1050 = vadd.f32 0.0, %v1049
  %v1051 = vpop.f32.mrb[0].mxu0
  %1052 = vmatprep.mubr.f32.mxu0 0.0
  %1053 = vmatmul.mubr.f32.gmra.mrb[0].mxu0 %v879
  %v1054 = vpop.f32.mrb[0].mxu0
  %v1055 = vadd.f32 0.0, %v1054
  %v1056 = vpop.f32.mrb[0].mxu0
  %1057 = vmatprep.mubr.f32.mxu0 0.0
  %1058 = vmatmul.mubr.f32.gmra.mrb[0].mxu0 %v882
  %v1059 = vpop.f32.mrb[0].mxu0
  %v1060 = vadd.f32 0.0, %v1059
  %v1061 = vpop.f32.mrb[0].mxu0
  %1062 = vmatprep.mubr.f32.mxu0 0.0
  %1063 = vmatmul.mubr.f32.gmra.mrb[0].mxu0 %v885
  %v1064 = vpop.f32.mrb[0].mxu0
  %v1065 = vadd.f32 0.0, %v1064
  %v1066 = vpop.f32.mrb[0].mxu0
  %1067 = vmatprep.mubr.f32.mxu0 0.0
  %1068 = vmatmul.mubr.f32.gmra.mrb[0].mxu0 %v888
  %v1069 = vpop.f32.mrb[0].mxu0
  %v1070 = vadd.f32 0.0, %v1069
  %v1071 = vpop.f32.mrb[0].mxu0
  %1072 = vmatprep.mubr.f32.mxu0 0.0
  %1073 = vmatmul.mubr.f32.gmra.mrb[0].mxu0 %v891
  %v1074 = vpop.f32.mrb[0].mxu0
  %v1075 = vadd.f32 0.0, %v1074
  %v1076 = vpop.f32.mrb[0].mxu0
  %1077 = vmatprep.mubr.f32.mxu0 0.0
  %1078 = vmatmul.mubr.f32.gmra.mrb[0].mxu0 %v894
  %v1079 = vpop.f32.mrb[0].mxu0
  %v1080 = vadd.f32 0.0, %v1079
  %v1081 = vpop.f32.mrb[0].mxu0
  %1082 = vmatprep.mubr.f32.mxu0 0.0
  %1083 = vmatmul.mubr.f32.gmra.mrb[0].mxu0 %v897
  %v1084 = vpop.f32.mrb[0].mxu0
  %v1085 = vadd.f32 0.0, %v1084
  %v1086 = vpop.f32.mrb[0].mxu0
  %1087 = vmatprep.mubr.f32.mxu0 0.0
  %1088 = vmatmul.mubr.f32.gmra.mrb[0].mxu0 %v900
  %v1089 = vpop.f32.mrb[0].mxu0
  %v1090 = vadd.f32 0.0, %v1089
  %v1091 = vpop.f32.mrb[0].mxu0
  %1092 = vmatprep.mubr.f32.mxu0 0.0
  %1093 = vmatmul.mubr.f32.gmra.mrb[0].mxu0 %v903
  %v1094 = vpop.f32.mrb[0].mxu0
  %v1095 = vadd.f32 0.0, %v1094
  %v1096 = vpop.f32.mrb[0].mxu0
  %1097 = vmatprep.mubr.f32.mxu0 0.0
  %1098 = vmatmul.mubr.f32.gmra.mrb[0].mxu0 %v906
  %v1099 = vpop.f32.mrb[0].mxu0
  %v1100 = vadd.f32 0.0, %v1099
  %v1101 = vpop.f32.mrb[0].mxu0
  %1102 = vmatprep.mubr.f32.mxu0 0.0
  %1103 = vmatmul.mubr.f32.gmra.mrb[0].mxu0 %v909
  %v1104 = vpop.f32.mrb[0].mxu0
  %v1105 = vadd.f32 0.0, %v1104
  %v1106 = vpop.f32.mrb[0].mxu0
  %1107 = vmatprep.mubr.f32.mxu0 0.0
  %1108 = vmatmul.mubr.f32.gmra.mrb[0].mxu0 %v912
  %v1109 = vpop.f32.mrb[0].mxu0
  %v1110 = vadd.f32 0.0, %v1109
  %v1111 = vpop.f32.mrb[0].mxu0
  %1112 = vmatprep.mubr.f32.mxu0 0.0
  %1113 = vmatmul.mubr.f32.gmra.mrb[0].mxu0 %v915
  %v1114 = vpop.f32.mrb[0].mxu0
  %v1115 = vadd.f32 0.0, %v1114
  %v1116 = vpop.f32.mrb[0].mxu0
  %1117 = vmatprep.mubr.f32.mxu0 0.0
  %1118 = vmatmul.mubr.f32.gmra.mrb[0].mxu0 %v918
  %v1119 = vpop.f32.mrb[0].mxu0
  %v1120 = vadd.f32 0.0, %v1119
  %v1121 = vpop.f32.mrb[0].mxu0
  %1122 = vmatprep.mubr.f32.mxu0 0.0
  %1123 = vmatmul.mubr.f32.gmra.mrb[0].mxu0 %v921
  %v1124 = vpop.f32.mrb[0].mxu0
  %v1125 = vadd.f32 0.0, %v1124
  %v1126 = vpop.f32.mrb[0].mxu0
  %1127 = vmatprep.mubr.f32.mxu0 0.0
  %1128 = vmatmul.mubr.f32.gmra.mrb[0].mxu0 %v924
  %v1129 = vpop.f32.mrb[0].mxu0
  %v1130 = vadd.f32 0.0, %v1129
  %v1131 = vpop.f32.mrb[0].mxu0
  %1132 = vmatprep.mubr.f32.mxu0 0.0
  %1133 = vmatmul.mubr.f32.gmra.mrb[0].mxu0 %v927
  %v1134 = vpop.f32.mrb[0].mxu0
  %v1135 = vadd.f32 0.0, %v1134
  %v1136 = vpop.f32.mrb[0].mxu0
  %1137 = vmatprep.mubr.f32.mxu0 0.0
  %1138 = vmatmul.mubr.f32.gmra.mrb[0].mxu0 %v930
  %v1139 = vpop.f32.mrb[0].mxu0
  %v1140 = vadd.f32 0.0, %v1139
  %v1141 = vpop.f32.mrb[0].mxu0
  %1142 = vmatprep.mubr.f32.mxu0 0.0
  %1143 = vmatmul.mubr.f32.gmra.mrb[0].mxu0 %v933
  %v1144 = vpop.f32.mrb[0].mxu0
  %v1145 = vadd.f32 0.0, %v1144
  %v1146 = vpop.f32.mrb[0].mxu0
  %1147 = vmatprep.mubr.f32.mxu0 0.0
  %1148 = vmatmul.mubr.f32.gmra.mrb[0].mxu0 %v936
  %v1149 = vpop.f32.mrb[0].mxu0
  %v1150 = vadd.f32 0.0, %v1149
  %v1151 = vpop.f32.mrb[0].mxu0
  %1152 = vmatprep.mubr.f32.mxu0 0.0
  %1153 = vmatmul.mubr.f32.gmra.mrb[0].mxu0 %v939
  %v1154 = vpop.f32.mrb[0].mxu0
  %v1155 = vadd.f32 0.0, %v1154
  %v1156 = vpop.f32.mrb[0].mxu0
  %1157 = vmatprep.mubr.f32.mxu0 0.0
  %1158 = vmatmul.mubr.f32.gmra.mrb[0].mxu0 %v942
  %v1159 = vpop.f32.mrb[0].mxu0
  %v1160 = vadd.f32 0.0, %v1159
  %v1161 = vpop.f32.mrb[0].mxu0
  %1162 = vmatprep.mubr.f32.mxu0 0.0
  %1163 = vmatmul.mubr.f32.gmra.mrb[0].mxu0 %v945
  %v1164 = vpop.f32.mrb[0].mxu0
  %v1165 = vadd.f32 0.0, %v1164
  %v1166 = vpop.f32.mrb[0].mxu0
  %1167 = vmatprep.mubr.f32.mxu0 0.0
  %1168 = vmatmul.mubr.f32.gmra.mrb[0].mxu0 %v948
  %v1169 = vpop.f32.mrb[0].mxu0
  %v1170 = vadd.f32 0.0, %v1169
  %v1171 = vpop.f32.mrb[0].mxu0
  %1172 = vmatprep.mubr.f32.mxu0 0.0
  %1173 = vmatmul.mubr.f32.gmra.mrb[0].mxu0 %v951
  %v1174 = vpop.f32.mrb[0].mxu0
  %v1175 = vadd.f32 0.0, %v1174
  %v1176 = vpop.f32.mrb[0].mxu0
  %1177 = vmatprep.mubr.f32.mxu0 0.0
  %1178 = vmatmul.mubr.f32.gmra.mrb[0].mxu0 %v954
  %v1179 = vpop.f32.mrb[0].mxu0
  %v1180 = vadd.f32 0.0, %v1179
  %v1181 = vpop.f32.mrb[0].mxu0
  %1182 = vmatprep.mubr.f32.mxu0 0.0
  %1183 = vmatmul.mubr.f32.gmra.mrb[0].mxu0 %v957
  %v1184 = vpop.f32.mrb[0].mxu0
  %v1185 = vadd.f32 0.0, %v1184
  %v1186 = vpop.f32.mrb[0].mxu0
  %1187 = vmatprep.mubr.f32.mxu0 0.0
  %1188 = vmatmul.mubr.f32.gmra.mrb[0].mxu0 %v960
  %v1189 = vpop.f32.mrb[0].mxu0
  %v1190 = vadd.f32 0.0, %v1189
  %v1191 = vpop.f32.mrb[0].mxu0
  %1192 = vmatprep.mubr.f32.mxu0 0.0
  %1193 = vmatmul.mubr.f32.gmra.mrb[0].mxu0 %v963
  %v1194 = vpop.f32.mrb[0].mxu0
  %v1195 = vadd.f32 0.0, %v1194
  %v1196 = vpop.f32.mrb[0].mxu0
  %1197 = vmatprep.mubr.f32.mxu0 0.0
  %1198 = vmatmul.mubr.f32.gmra.mrb[0].mxu0 %v966
  %v1199 = vpop.f32.mrb[0].mxu0
  %v1200 = vadd.f32 0.0, %v1199
  %v1201 = vpop.f32.mrb[0].mxu0
  %1202 = vmatprep.mubr.f32.mxu0 0.0
  %1203 = vmatmul.mubr.f32.gmra.mrb[0].mxu0 %v969
  %v1204 = vpop.f32.mrb[0].mxu0
  %v1205 = vadd.f32 0.0, %v1204
  %v1206 = vpop.f32.mrb[0].mxu0
  %1207 = vmatprep.mubr.f32.mxu0 0.0
  %1208 = vmatmul.mubr.f32.gmra.mrb[0].mxu0 %v972
  %v1209 = vpop.f32.mrb[0].mxu0
  %v1210 = vadd.f32 0.0, %v1209
  %v1211 = vpop.f32.mrb[0].mxu0
  %1212 = vmatprep.mubr.f32.mxu0 0.0
  %1213 = vmatmul.mubr.f32.gmra.mrb[0].mxu0 %v975
  %v1214 = vpop.f32.mrb[0].mxu0
  %v1215 = vadd.f32 0.0, %v1214
  %v1216 = vpop.f32.mrb[0].mxu0
  %1217 = vmatprep.mubr.f32.mxu0 0.0
  %1218 = vmatmul.mubr.f32.gmra.mrb[0].mxu0 %v978
  %v1219 = vpop.f32.mrb[0].mxu0
  %v1220 = vadd.f32 0.0, %v1219
  %v1221 = vpop.f32.mrb[0].mxu0
  %1222 = vmatprep.mubr.f32.mxu0 0.0
  %1223 = vmatmul.mubr.f32.gmra.mrb[0].mxu0 %v981
  %v1224 = vpop.f32.mrb[0].mxu0
  %v1225 = vadd.f32 0.0, %v1224
  %v1226 = vpop.f32.mrb[0].mxu0
  %1227 = vdwg.mxu0
  %v1228 = vmax.f32 %v802, %v1050
  %v1229 = vmax.f32 %v803, %v1055
  %v1230 = vmax.f32 %v804, %v1060
  %v1231 = vmax.f32 %v805, %v1065
  %v1232 = vmax.f32 %v806, %v1070
  %v1233 = vmax.f32 %v807, %v1075
  %v1234 = vmax.f32 %v808, %v1080
  %v1235 = vmax.f32 %v809, %v1085
  %v1236 = vmax.f32 %v810, %v1090
  %v1237 = vmax.f32 %v811, %v1095
  %v1238 = vmax.f32 %v812, %v1100
  %v1239 = vmax.f32 %v813, %v1105
  %v1240 = vmax.f32 %v814, %v1110
  %v1241 = vmax.f32 %v815, %v1115
  %v1242 = vmax.f32 %v816, %v1120
  %v1243 = vmax.f32 %v817, %v1125
  %v1244 = vmax.f32 %v818, %v1130
  %v1245 = vmax.f32 %v819, %v1135
  %v1246 = vmax.f32 %v820, %v1140
  %v1247 = vmax.f32 %v821, %v1145
  %v1248 = vmax.f32 %v822, %v1150
  %v1249 = vmax.f32 %v823, %v1155
  %v1250 = vmax.f32 %v824, %v1160
  %v1251 = vmax.f32 %v825, %v1165
  %v1252 = vmax.f32 %v826, %v1170
  %v1253 = vmax.f32 %v827, %v1175
  %v1254 = vmax.f32 %v828, %v1180
  %v1255 = vmax.f32 %v829, %v1185
  %v1256 = vmax.f32 %v830, %v1190
  %v1257 = vmax.f32 %v831, %v1195
  %v1258 = vmax.f32 %v832, %v1200
  %v1259 = vmax.f32 %v833, %v1205
  %v1260 = vmax.f32 %v834, %v1210
  %v1261 = vmax.f32 %v835, %v1215
  %v1262 = vmax.f32 %v836, %v1220
  %v1263 = vmax.f32 %v837, %v1225
  %s1264 = scalar_lea.vmem %s0, 864
  %v1265 = vld [vmem:[%s1264] sm:$0xff]
  %v1266 = vld [vmem:[%s1264 + $0x8] sm:$0xff]
  %v1267 = vld [vmem:[%s1264 + $0x10] sm:$0xff]
  %v1268 = vld [vmem:[%s1264 + $0x18] sm:$0xff]
  %v1269 = vld [vmem:[%s1264 + $0x20] sm:$0xff]
  %v1270 = vld [vmem:[%s1264 + $0x28] sm:$0xff]
  %v1271 = vld [vmem:[%s1264 + $0x30] sm:$0xff]
  %v1272 = vld [vmem:[%s1264 + $0x38] sm:$0xff]
  %v1273 = vld [vmem:[%s1264 + $0x40] sm:$0xff]
  %v1274 = vld [vmem:[%s1264 + $0x48] sm:$0xff]
  %v1275 = vld [vmem:[%s1264 + $0x50] sm:$0xff]
  %v1276 = vld [vmem:[%s1264 + $0x58] sm:$0xff]
  %v1277 = vld [vmem:[%s1264 + $0x60] sm:$0xff]
  %v1278 = vld [vmem:[%s1264 + $0x68] sm:$0xff]
  %v1279 = vld [vmem:[%s1264 + $0x70] sm:$0xff]
  %v1280 = vld [vmem:[%s1264 + $0x78] sm:$0xff]
  %v1281 = vld [vmem:[%s1264 + $0x80] sm:$0xff]
  %v1282 = vld [vmem:[%s1264 + $0x88] sm:$0xff]
  %v1283 = vld [vmem:[%s1264 + $0x90] sm:$0xff]
  %v1284 = vld [vmem:[%s1264 + $0x98] sm:$0xff]
  %v1285 = vld [vmem:[%s1264 + $0xa0] sm:$0xff]
  %v1286 = vld [vmem:[%s1264 + $0xa8] sm:$0xff]
  %v1287 = vld [vmem:[%s1264 + $0xb0] sm:$0xff]
  %v1288 = vld [vmem:[%s1264 + $0xb8] sm:$0xff]
  %v1289 = vld [vmem:[%s1264 + $0xc0] sm:$0xff]
  %v1290 = vld [vmem:[%s1264 + $0xc8] sm:$0xff]
  %v1291 = vld [vmem:[%s1264 + $0xd0] sm:$0xff]
  %v1292 = vld [vmem:[%s1264 + $0xd8] sm:$0xff]
  %v1293 = vld [vmem:[%s1264 + $0xe0] sm:$0xff]
  %v1294 = vld [vmem:[%s1264 + $0xe8] sm:$0xff]
  %v1295 = vld [vmem:[%s1264 + $0xf0] sm:$0xff]
  %v1296 = vld [vmem:[%s1264 + $0xf8] sm:$0xff]
  %v1297 = vld [vmem:[%s1264 + $0x100] sm:$0xff]
  %v1298 = vld [vmem:[%s1264 + $0x108] sm:$0xff]
  %v1299 = vld [vmem:[%s1264 + $0x110] sm:$0xff]
  %v1300 = vld [vmem:[%s1264 + $0x118] sm:$0xff]
  %v1302 = vsel %vm54, %v1265, 0
  %v1305 = vsel %vm54, %v1266, 0
  %v1308 = vsel %vm54, %v1267, 0
  %v1311 = vsel %vm54, %v1268, 0
  %v1314 = vsel %vm54, %v1269, 0
  %v1317 = vsel %vm54, %v1270, 0
  %v1320 = vsel %vm54, %v1271, 0
  %v1323 = vsel %vm54, %v1272, 0
  %v1326 = vsel %vm54, %v1273, 0
  %v1329 = vsel %vm54, %v1274, 0
  %v1332 = vsel %vm54, %v1275, 0
  %v1335 = vsel %vm54, %v1276, 0
  %v1338 = vsel %vm54, %v1277, 0
  %v1341 = vsel %vm54, %v1278, 0
  %v1344 = vsel %vm54, %v1279, 0
  %v1347 = vsel %vm54, %v1280, 0
  %v1350 = vsel %vm54, %v1281, 0
  %v1353 = vsel %vm54, %v1282, 0
  %v1356 = vsel %vm54, %v1283, 0
  %v1359 = vsel %vm54, %v1284, 0
  %v1362 = vsel %vm54, %v1285, 0
  %v1365 = vsel %vm54, %v1286, 0
  %v1368 = vsel %vm54, %v1287, 0
  %v1371 = vsel %vm54, %v1288, 0
  %v1374 = vsel %vm54, %v1289, 0
  %v1377 = vsel %vm54, %v1290, 0
  %v1380 = vsel %vm54, %v1291, 0
  %v1383 = vsel %vm54, %v1292, 0
  %v1386 = vsel %vm54, %v1293, 0
  %v1389 = vsel %vm54, %v1294, 0
  %v1392 = vsel %vm54, %v1295, 0
  %v1395 = vsel %vm54, %v1296, 0
  %v1398 = vsel %vm54, %v1297, 0
  %v1401 = vsel %vm54, %v1298, 0
  %v1404 = vsel %vm54, %v1299, 0
  %v1407 = vsel %vm54, %v1300, 0
  %1409 = vmatprep.subr.mxu0 0.0
  %1410 = vmatpush1.msra.mxu0 %v14
  %1411 = vmatprep.subr.mxu0 0.0
  %1412 = vmatpush1.msra.mxu0 %v15
  %1413 = vmatprep.subr.mxu0 0.0
  %1414 = vmatpush1.msra.mxu0 %v16
  %1415 = vmatprep.subr.mxu0 0.0
  %1416 = vmatpush1.msra.mxu0 %v165
  %1417 = vmatprep.subr.mxu0 0.0
  %1418 = vmatpush1.msra.mxu0 0.0
  %1419 = vmatprep.subr.mxu0 0.0
  %1420 = vmatpush1.msra.mxu0 0.0
  %1421 = vmatprep.subr.mxu0 0.0
  %1422 = vmatpush1.msra.mxu0 0.0
  %1423 = vmatprep.subr.mxu0 0.0
  %1424 = vmatpush1.msra.mxu0 0.0
  %1425 = vmatprep.subr.mxu0 0.0
  %1426 = vmatpush1.msra.mxu0 0.0
  %1427 = vmatprep.subr.mxu0 0.0
  %1428 = vmatpush1.msra.mxu0 0.0
  %1429 = vmatprep.subr.mxu0 0.0
  %1430 = vmatpush1.msra.mxu0 0.0
  %1431 = vmatprep.subr.mxu0 0.0
  %1432 = vmatpush1.msra.mxu0 0.0
  %1433 = vmatprep.subr.mxu0 0.0
  %1434 = vmatpush1.msra.mxu0 0.0
  %1435 = vmatprep.subr.mxu0 0.0
  %1436 = vmatpush1.msra.mxu0 0.0
  %1437 = vmatprep.subr.mxu0 0.0
  %1438 = vmatpush1.msra.mxu0 0.0
  %1439 = vmatprep.subr.mxu0 0.0
  %1440 = vmatpush1.msra.mxu0 0.0
  %1441 = vmatprep.subr.mxu0 0.0
  %1442 = vmatpush1.msra.mxu0 0.0
  %1443 = vmatprep.subr.mxu0 0.0
  %1444 = vmatpush1.msra.mxu0 0.0
  %1445 = vmatprep.subr.mxu0 0.0
  %1446 = vmatpush1.msra.mxu0 0.0
  %1447 = vmatprep.subr.mxu0 0.0
  %1448 = vmatpush1.msra.mxu0 0.0
  %1449 = vmatprep.subr.mxu0 0.0
  %1450 = vmatpush1.msra.mxu0 0.0
  %1451 = vmatprep.subr.mxu0 0.0
  %1452 = vmatpush1.msra.mxu0 0.0
  %1453 = vmatprep.subr.mxu0 0.0
  %1454 = vmatpush1.msra.mxu0 0.0
  %1455 = vmatprep.subr.mxu0 0.0
  %1456 = vmatpush1.msra.mxu0 0.0
  %1457 = vmatprep.subr.mxu0 0.0
  %1458 = vmatpush1.msra.mxu0 0.0
  %1459 = vmatprep.subr.mxu0 0.0
  %1460 = vmatpush1.msra.mxu0 0.0
  %1461 = vmatprep.subr.mxu0 0.0
  %1462 = vmatpush1.msra.mxu0 0.0
  %1463 = vmatprep.subr.mxu0 0.0
  %1464 = vmatpush1.msra.mxu0 0.0
  %1465 = vmatprep.subr.mxu0 0.0
  %1466 = vmatpush1.msra.mxu0 0.0
  %1467 = vmatprep.subr.mxu0 0.0
  %1468 = vmatpush1.msra.mxu0 0.0
  %1469 = vmatprep.subr.mxu0 0.0
  %1470 = vmatpush1.msra.mxu0 0.0
  %1471 = vmatprep.subr.mxu0 0.0
  %1472 = vmatpush1.msra.mxu0 0.0
  %1473 = vmatprep.mubr.f32.mxu0 0.0
  %1474 = vmatmul.mubr.f32.gmra.mrb[0].mxu0 %v1302
  %v1475 = vpop.f32.mrb[0].mxu0
  %v1476 = vadd.f32 0.0, %v1475
  %v1477 = vpop.f32.mrb[0].mxu0
  %1478 = vmatprep.mubr.f32.mxu0 0.0
  %1479 = vmatmul.mubr.f32.gmra.mrb[0].mxu0 %v1305
  %v1480 = vpop.f32.mrb[0].mxu0
  %v1481 = vadd.f32 0.0, %v1480
  %v1482 = vpop.f32.mrb[0].mxu0
  %1483 = vmatprep.mubr.f32.mxu0 0.0
  %1484 = vmatmul.mubr.f32.gmra.mrb[0].mxu0 %v1308
  %v1485 = vpop.f32.mrb[0].mxu0
  %v1486 = vadd.f32 0.0, %v1485
  %v1487 = vpop.f32.mrb[0].mxu0
  %1488 = vmatprep.mubr.f32.mxu0 0.0
  %1489 = vmatmul.mubr.f32.gmra.mrb[0].mxu0 %v1311
  %v1490 = vpop.f32.mrb[0].mxu0
  %v1491 = vadd.f32 0.0, %v1490
  %v1492 = vpop.f32.mrb[0].mxu0
  %1493 = vmatprep.mubr.f32.mxu0 0.0
  %1494 = vmatmul.mubr.f32.gmra.mrb[0].mxu0 %v1314
  %v1495 = vpop.f32.mrb[0].mxu0
  %v1496 = vadd.f32 0.0, %v1495
  %v1497 = vpop.f32.mrb[0].mxu0
  %1498 = vmatprep.mubr.f32.mxu0 0.0
  %1499 = vmatmul.mubr.f32.gmra.mrb[0].mxu0 %v1317
  %v1500 = vpop.f32.mrb[0].mxu0
  %v1501 = vadd.f32 0.0, %v1500
  %v1502 = vpop.f32.mrb[0].mxu0
  %1503 = vmatprep.mubr.f32.mxu0 0.0
  %1504 = vmatmul.mubr.f32.gmra.mrb[0].mxu0 %v1320
  %v1505 = vpop.f32.mrb[0].mxu0
  %v1506 = vadd.f32 0.0, %v1505
  %v1507 = vpop.f32.mrb[0].mxu0
  %1508 = vmatprep.mubr.f32.mxu0 0.0
  %1509 = vmatmul.mubr.f32.gmra.mrb[0].mxu0 %v1323
  %v1510 = vpop.f32.mrb[0].mxu0
  %v1511 = vadd.f32 0.0, %v1510
  %v1512 = vpop.f32.mrb[0].mxu0
  %1513 = vmatprep.mubr.f32.mxu0 0.0
  %1514 = vmatmul.mubr.f32.gmra.mrb[0].mxu0 %v1326
  %v1515 = vpop.f32.mrb[0].mxu0
  %v1516 = vadd.f32 0.0, %v1515
  %v1517 = vpop.f32.mrb[0].mxu0
  %1518 = vmatprep.mubr.f32.mxu0 0.0
  %1519 = vmatmul.mubr.f32.gmra.mrb[0].mxu0 %v1329
  %v1520 = vpop.f32.mrb[0].mxu0
  %v1521 = vadd.f32 0.0, %v1520
  %v1522 = vpop.f32.mrb[0].mxu0
  %1523 = vmatprep.mubr.f32.mxu0 0.0
  %1524 = vmatmul.mubr.f32.gmra.mrb[0].mxu0 %v1332
  %v1525 = vpop.f32.mrb[0].mxu0
  %v1526 = vadd.f32 0.0, %v1525
  %v1527 = vpop.f32.mrb[0].mxu0
  %1528 = vmatprep.mubr.f32.mxu0 0.0
  %1529 = vmatmul.mubr.f32.gmra.mrb[0].mxu0 %v1335
  %v1530 = vpop.f32.mrb[0].mxu0
  %v1531 = vadd.f32 0.0, %v1530
  %v1532 = vpop.f32.mrb[0].mxu0
  %1533 = vmatprep.mubr.f32.mxu0 0.0
  %1534 = vmatmul.mubr.f32.gmra.mrb[0].mxu0 %v1338
  %v1535 = vpop.f32.mrb[0].mxu0
  %v1536 = vadd.f32 0.0, %v1535
  %v1537 = vpop.f32.mrb[0].mxu0
  %1538 = vmatprep.mubr.f32.mxu0 0.0
  %1539 = vmatmul.mubr.f32.gmra.mrb[0].mxu0 %v1341
  %v1540 = vpop.f32.mrb[0].mxu0
  %v1541 = vadd.f32 0.0, %v1540
  %v1542 = vpop.f32.mrb[0].mxu0
  %1543 = vmatprep.mubr.f32.mxu0 0.0
  %1544 = vmatmul.mubr.f32.gmra.mrb[0].mxu0 %v1344
  %v1545 = vpop.f32.mrb[0].mxu0
  %v1546 = vadd.f32 0.0, %v1545
  %v1547 = vpop.f32.mrb[0].mxu0
  %1548 = vmatprep.mubr.f32.mxu0 0.0
  %1549 = vmatmul.mubr.f32.gmra.mrb[0].mxu0 %v1347
  %v1550 = vpop.f32.mrb[0].mxu0
  %v1551 = vadd.f32 0.0, %v1550
  %v1552 = vpop.f32.mrb[0].mxu0
  %1553 = vmatprep.mubr.f32.mxu0 0.0
  %1554 = vmatmul.mubr.f32.gmra.mrb[0].mxu0 %v1350
  %v1555 = vpop.f32.mrb[0].mxu0
  %v1556 = vadd.f32 0.0, %v1555
  %v1557 = vpop.f32.mrb[0].mxu0
  %1558 = vmatprep.mubr.f32.mxu0 0.0
  %1559 = vmatmul.mubr.f32.gmra.mrb[0].mxu0 %v1353
  %v1560 = vpop.f32.mrb[0].mxu0
  %v1561 = vadd.f32 0.0, %v1560
  %v1562 = vpop.f32.mrb[0].mxu0
  %1563 = vmatprep.mubr.f32.mxu0 0.0
  %1564 = vmatmul.mubr.f32.gmra.mrb[0].mxu0 %v1356
  %v1565 = vpop.f32.mrb[0].mxu0
  %v1566 = vadd.f32 0.0, %v1565
  %v1567 = vpop.f32.mrb[0].mxu0
  %1568 = vmatprep.mubr.f32.mxu0 0.0
  %1569 = vmatmul.mubr.f32.gmra.mrb[0].mxu0 %v1359
  %v1570 = vpop.f32.mrb[0].mxu0
  %v1571 = vadd.f32 0.0, %v1570
  %v1572 = vpop.f32.mrb[0].mxu0
  %1573 = vmatprep.mubr.f32.mxu0 0.0
  %1574 = vmatmul.mubr.f32.gmra.mrb[0].mxu0 %v1362
  %v1575 = vpop.f32.mrb[0].mxu0
  %v1576 = vadd.f32 0.0, %v1575
  %v1577 = vpop.f32.mrb[0].mxu0
  %1578 = vmatprep.mubr.f32.mxu0 0.0
  %1579 = vmatmul.mubr.f32.gmra.mrb[0].mxu0 %v1365
  %v1580 = vpop.f32.mrb[0].mxu0
  %v1581 = vadd.f32 0.0, %v1580
  %v1582 = vpop.f32.mrb[0].mxu0
  %1583 = vmatprep.mubr.f32.mxu0 0.0
  %1584 = vmatmul.mubr.f32.gmra.mrb[0].mxu0 %v1368
  %v1585 = vpop.f32.mrb[0].mxu0
  %v1586 = vadd.f32 0.0, %v1585
  %v1587 = vpop.f32.mrb[0].mxu0
  %1588 = vmatprep.mubr.f32.mxu0 0.0
  %1589 = vmatmul.mubr.f32.gmra.mrb[0].mxu0 %v1371
  %v1590 = vpop.f32.mrb[0].mxu0
  %v1591 = vadd.f32 0.0, %v1590
  %v1592 = vpop.f32.mrb[0].mxu0
  %1593 = vmatprep.mubr.f32.mxu0 0.0
  %1594 = vmatmul.mubr.f32.gmra.mrb[0].mxu0 %v1374
  %v1595 = vpop.f32.mrb[0].mxu0
  %v1596 = vadd.f32 0.0, %v1595
  %v1597 = vpop.f32.mrb[0].mxu0
  %1598 = vmatprep.mubr.f32.mxu0 0.0
  %1599 = vmatmul.mubr.f32.gmra.mrb[0].mxu0 %v1377
  %v1600 = vpop.f32.mrb[0].mxu0
  %v1601 = vadd.f32 0.0, %v1600
  %v1602 = vpop.f32.mrb[0].mxu0
  %1603 = vmatprep.mubr.f32.mxu0 0.0
  %1604 = vmatmul.mubr.f32.gmra.mrb[0].mxu0 %v1380
  %v1605 = vpop.f32.mrb[0].mxu0
  %v1606 = vadd.f32 0.0, %v1605
  %v1607 = vpop.f32.mrb[0].mxu0
  %1608 = vmatprep.mubr.f32.mxu0 0.0
  %1609 = vmatmul.mubr.f32.gmra.mrb[0].mxu0 %v1383
  %v1610 = vpop.f32.mrb[0].mxu0
  %v1611 = vadd.f32 0.0, %v1610
  %v1612 = vpop.f32.mrb[0].mxu0
  %1613 = vmatprep.mubr.f32.mxu0 0.0
  %1614 = vmatmul.mubr.f32.gmra.mrb[0].mxu0 %v1386
  %v1615 = vpop.f32.mrb[0].mxu0
  %v1616 = vadd.f32 0.0, %v1615
  %v1617 = vpop.f32.mrb[0].mxu0
  %1618 = vmatprep.mubr.f32.mxu0 0.0
  %1619 = vmatmul.mubr.f32.gmra.mrb[0].mxu0 %v1389
  %v1620 = vpop.f32.mrb[0].mxu0
  %v1621 = vadd.f32 0.0, %v1620
  %v1622 = vpop.f32.mrb[0].mxu0
  %1623 = vmatprep.mubr.f32.mxu0 0.0
  %1624 = vmatmul.mubr.f32.gmra.mrb[0].mxu0 %v1392
  %v1625 = vpop.f32.mrb[0].mxu0
  %v1626 = vadd.f32 0.0, %v1625
  %v1627 = vpop.f32.mrb[0].mxu0
  %1628 = vmatprep.mubr.f32.mxu0 0.0
  %1629 = vmatmul.mubr.f32.gmra.mrb[0].mxu0 %v1395
  %v1630 = vpop.f32.mrb[0].mxu0
  %v1631 = vadd.f32 0.0, %v1630
  %v1632 = vpop.f32.mrb[0].mxu0
  %1633 = vmatprep.mubr.f32.mxu0 0.0
  %1634 = vmatmul.mubr.f32.gmra.mrb[0].mxu0 %v1398
  %v1635 = vpop.f32.mrb[0].mxu0
  %v1636 = vadd.f32 0.0, %v1635
  %v1637 = vpop.f32.mrb[0].mxu0
  %1638 = vmatprep.mubr.f32.mxu0 0.0
  %1639 = vmatmul.mubr.f32.gmra.mrb[0].mxu0 %v1401
  %v1640 = vpop.f32.mrb[0].mxu0
  %v1641 = vadd.f32 0.0, %v1640
  %v1642 = vpop.f32.mrb[0].mxu0
  %1643 = vmatprep.mubr.f32.mxu0 0.0
  %1644 = vmatmul.mubr.f32.gmra.mrb[0].mxu0 %v1404
  %v1645 = vpop.f32.mrb[0].mxu0
  %v1646 = vadd.f32 0.0, %v1645
  %v1647 = vpop.f32.mrb[0].mxu0
  %1648 = vmatprep.mubr.f32.mxu0 0.0
  %1649 = vmatmul.mubr.f32.gmra.mrb[0].mxu0 %v1407
  %v1650 = vpop.f32.mrb[0].mxu0
  %v1651 = vadd.f32 0.0, %v1650
  %v1652 = vpop.f32.mrb[0].mxu0
  %1653 = vdwg.mxu0
  %v1654 = vmax.f32 %v1228, %v1476
  %v1655 = vmax.f32 %v1229, %v1481
  %v1656 = vmax.f32 %v1230, %v1486
  %v1657 = vmax.f32 %v1231, %v1491
  %v1658 = vmax.f32 %v1232, %v1496
  %v1659 = vmax.f32 %v1233, %v1501
  %v1660 = vmax.f32 %v1234, %v1506
  %v1661 = vmax.f32 %v1235, %v1511
  %v1662 = vmax.f32 %v1236, %v1516
  %v1663 = vmax.f32 %v1237, %v1521
  %v1664 = vmax.f32 %v1238, %v1526
  %v1665 = vmax.f32 %v1239, %v1531
  %v1666 = vmax.f32 %v1240, %v1536
  %v1667 = vmax.f32 %v1241, %v1541
  %v1668 = vmax.f32 %v1242, %v1546
  %v1669 = vmax.f32 %v1243, %v1551
  %v1670 = vmax.f32 %v1244, %v1556
  %v1671 = vmax.f32 %v1245, %v1561
  %v1672 = vmax.f32 %v1246, %v1566
  %v1673 = vmax.f32 %v1247, %v1571
  %v1674 = vmax.f32 %v1248, %v1576
  %v1675 = vmax.f32 %v1249, %v1581
  %v1676 = vmax.f32 %v1250, %v1586
  %v1677 = vmax.f32 %v1251, %v1591
  %v1678 = vmax.f32 %v1252, %v1596
  %v1679 = vmax.f32 %v1253, %v1601
  %v1680 = vmax.f32 %v1254, %v1606
  %v1681 = vmax.f32 %v1255, %v1611
  %v1682 = vmax.f32 %v1256, %v1616
  %v1683 = vmax.f32 %v1257, %v1621
  %v1684 = vmax.f32 %v1258, %v1626
  %v1685 = vmax.f32 %v1259, %v1631
  %v1686 = vmax.f32 %v1260, %v1636
  %v1687 = vmax.f32 %v1261, %v1641
  %v1688 = vmax.f32 %v1262, %v1646
  %v1689 = vmax.f32 %v1263, %v1651
  %v1690 = vld [vmem:[%s2] sm:$0x1]
  %v1692 = vlaneseq
  %v1693 = vshrl.u32 %v1692, 7
  %v1694 = vsub.s32 0, %v1693
  %v1695 = vrot.slane %v1690, %v1694
  %v1697 = vadd.f32 %v1654, %v1695
  %v1698 = vadd.f32 %v1655, %v1695
  %v1699 = vadd.f32 %v1656, %v1695
  %v1700 = vadd.f32 %v1657, %v1695
  %v1701 = vadd.f32 %v1658, %v1695
  %v1702 = vadd.f32 %v1659, %v1695
  %v1703 = vadd.f32 %v1660, %v1695
  %v1704 = vadd.f32 %v1661, %v1695
  %v1705 = vadd.f32 %v1662, %v1695
  %v1706 = vadd.f32 %v1663, %v1695
  %v1707 = vadd.f32 %v1664, %v1695
  %v1708 = vadd.f32 %v1665, %v1695
  %v1709 = vadd.f32 %v1666, %v1695
  %v1710 = vadd.f32 %v1667, %v1695
  %v1711 = vadd.f32 %v1668, %v1695
  %v1712 = vadd.f32 %v1669, %v1695
  %v1713 = vadd.f32 %v1670, %v1695
  %v1714 = vadd.f32 %v1671, %v1695
  %v1715 = vadd.f32 %v1672, %v1695
  %v1716 = vadd.f32 %v1673, %v1695
  %v1717 = vadd.f32 %v1674, %v1695
  %v1718 = vadd.f32 %v1675, %v1695
  %v1719 = vadd.f32 %v1676, %v1695
  %v1720 = vadd.f32 %v1677, %v1695
  %v1721 = vadd.f32 %v1678, %v1695
  %v1722 = vadd.f32 %v1679, %v1695
  %v1723 = vadd.f32 %v1680, %v1695
  %v1724 = vadd.f32 %v1681, %v1695
  %v1725 = vadd.f32 %v1682, %v1695
  %v1726 = vadd.f32 %v1683, %v1695
  %v1727 = vadd.f32 %v1684, %v1695
  %v1728 = vadd.f32 %v1685, %v1695
  %v1729 = vadd.f32 %v1686, %v1695
  %v1730 = vadd.f32 %v1687, %v1695
  %v1731 = vadd.f32 %v1688, %v1695
  %v1732 = vadd.f32 %v1689, %v1695
  %v1733 = vmax.f32 %v1697, 0.0
  %v1734 = vmax.f32 %v1698, 0.0
  %v1735 = vmax.f32 %v1699, 0.0
  %v1736 = vmax.f32 %v1700, 0.0
  %v1737 = vmax.f32 %v1701, 0.0
  %v1738 = vmax.f32 %v1702, 0.0
  %v1739 = vmax.f32 %v1703, 0.0
  %v1740 = vmax.f32 %v1704, 0.0
  %v1741 = vmax.f32 %v1705, 0.0
  %v1742 = vmax.f32 %v1706, 0.0
  %v1743 = vmax.f32 %v1707, 0.0
  %v1744 = vmax.f32 %v1708, 0.0
  %v1745 = vmax.f32 %v1709, 0.0
  %v1746 = vmax.f32 %v1710, 0.0
  %v1747 = vmax.f32 %v1711, 0.0
  %v1748 = vmax.f32 %v1712, 0.0
  %v1749 = vmax.f32 %v1713, 0.0
  %v1750 = vmax.f32 %v1714, 0.0
  %v1751 = vmax.f32 %v1715, 0.0
  %v1752 = vmax.f32 %v1716, 0.0
  %v1753 = vmax.f32 %v1717, 0.0
  %v1754 = vmax.f32 %v1718, 0.0
  %v1755 = vmax.f32 %v1719, 0.0
  %v1756 = vmax.f32 %v1720, 0.0
  %v1757 = vmax.f32 %v1721, 0.0
  %v1758 = vmax.f32 %v1722, 0.0
  %v1759 = vmax.f32 %v1723, 0.0
  %v1760 = vmax.f32 %v1724, 0.0
  %v1761 = vmax.f32 %v1725, 0.0
  %v1762 = vmax.f32 %v1726, 0.0
  %v1763 = vmax.f32 %v1727, 0.0
  %v1764 = vmax.f32 %v1728, 0.0
  %v1765 = vmax.f32 %v1729, 0.0
  %v1766 = vmax.f32 %v1730, 0.0
  %v1767 = vmax.f32 %v1731, 0.0
  %v1768 = vmax.f32 %v1732, 0.0
  %vm1769 = vcmask 80896
  %1770 = vst.msk [vmem:[%s3] sm:$0xff] %vm1769, %v1733
  %1771 = vst.msk [vmem:[%s3 + $0x8] sm:$0xff] %vm1769, %v1734
  %1772 = vst.msk [vmem:[%s3 + $0x10] sm:$0xff] %vm1769, %v1735
  %1773 = vst.msk [vmem:[%s3 + $0x18] sm:$0xff] %vm1769, %v1736
  %1774 = vst.msk [vmem:[%s3 + $0x20] sm:$0xff] %vm1769, %v1737
  %1775 = vst.msk [vmem:[%s3 + $0x28] sm:$0xff] %vm1769, %v1738
  %1776 = vst.msk [vmem:[%s3 + $0x30] sm:$0xff] %vm1769, %v1739
  %1777 = vst.msk [vmem:[%s3 + $0x38] sm:$0xff] %vm1769, %v1740
  %1778 = vst.msk [vmem:[%s3 + $0x40] sm:$0xff] %vm1769, %v1741
  %1779 = vst.msk [vmem:[%s3 + $0x48] sm:$0xff] %vm1769, %v1742
  %1780 = vst.msk [vmem:[%s3 + $0x50] sm:$0xff] %vm1769, %v1743
  %1781 = vst.msk [vmem:[%s3 + $0x58] sm:$0xff] %vm1769, %v1744
  %1782 = vst.msk [vmem:[%s3 + $0x60] sm:$0xff] %vm1769, %v1745
  %1783 = vst.msk [vmem:[%s3 + $0x68] sm:$0xff] %vm1769, %v1746
  %1784 = vst.msk [vmem:[%s3 + $0x70] sm:$0xff] %vm1769, %v1747
  %1785 = vst.msk [vmem:[%s3 + $0x78] sm:$0xff] %vm1769, %v1748
  %1786 = vst.msk [vmem:[%s3 + $0x80] sm:$0xff] %vm1769, %v1749
  %1787 = vst.msk [vmem:[%s3 + $0x88] sm:$0xff] %vm1769, %v1750
  %1788 = vst.msk [vmem:[%s3 + $0x90] sm:$0xff] %vm1769, %v1751
  %1789 = vst.msk [vmem:[%s3 + $0x98] sm:$0xff] %vm1769, %v1752
  %1790 = vst.msk [vmem:[%s3 + $0xa0] sm:$0xff] %vm1769, %v1753
  %1791 = vst.msk [vmem:[%s3 + $0xa8] sm:$0xff] %vm1769, %v1754
  %1792 = vst.msk [vmem:[%s3 + $0xb0] sm:$0xff] %vm1769, %v1755
  %1793 = vst.msk [vmem:[%s3 + $0xb8] sm:$0xff] %vm1769, %v1756
  %1794 = vst.msk [vmem:[%s3 + $0xc0] sm:$0xff] %vm1769, %v1757
  %1795 = vst.msk [vmem:[%s3 + $0xc8] sm:$0xff] %vm1769, %v1758
  %1796 = vst.msk [vmem:[%s3 + $0xd0] sm:$0xff] %vm1769, %v1759
  %1797 = vst.msk [vmem:[%s3 + $0xd8] sm:$0xff] %vm1769, %v1760
  %1798 = vst.msk [vmem:[%s3 + $0xe0] sm:$0xff] %vm1769, %v1761
  %1799 = vst.msk [vmem:[%s3 + $0xe8] sm:$0xff] %vm1769, %v1762
  %1800 = vst.msk [vmem:[%s3 + $0xf0] sm:$0xff] %vm1769, %v1763
  %1801 = vst.msk [vmem:[%s3 + $0xf8] sm:$0xff] %vm1769, %v1764
  %1802 = vst.msk [vmem:[%s3 + $0x100] sm:$0xff] %vm1769, %v1765
  %1803 = vst.msk [vmem:[%s3 + $0x108] sm:$0xff] %vm1769, %v1766
  %1804 = vst.msk [vmem:[%s3 + $0x110] sm:$0xff] %vm1769, %v1767
  %1805 = vst.msk [vmem:[%s3 + $0x118] sm:$0xff] %vm1769, %v1768
  // Predicated region
  $region14: #{my_network_forward.3} parent=0 // pred_check
    _
  $region15: #{my_network_forward.3} parent=0 // pred_check_branch
    %1807 = sbr.rel (0) target = $region17
  $region16: #{my_network_forward.3} parent=0 // pred_region
    _
  $region17: #{my_network_forward.3} parent=0 // pred_fallthru
    _
  // Predicated region
  $region18: #{my_network_forward.3} parent=0 // pred_check
    _
  $region19: #{my_network_forward.3} parent=0 // pred_check_branch
    %1809 = sbr.rel (0) target = $region21
  $region20: #{my_network_forward.3} parent=0 // pred_region
    _
  $region21: #{my_network_forward.3} parent=0 // pred_fallthru
    _

// kernel: my_network_forward.4
$region0: #{my_network_forward.4}
  #allocation0 [shape = 'u32[]', space=smem, size = 0x4, offset = 0x4, fixed_abs, tag = 'smem constant byte address 0x4 - core index']
  #allocation1 [shape = 'u32[144,128]{1,0:T(1,128)}', space=vmem, size = 0x12000, scoped, tag = 'internal scratch']
  %s0 = inlined_call_operand.vmem [shape: f32[4,32,250], index: 0, kind: input, shape index: {}]
  %s1 = inlined_call_operand.vmem [shape: f32[250,20], index: 1, kind: input, shape index: {}]
  %s2 = inlined_call_operand.vmem [shape: f32[1,20], index: 2, kind: input, shape index: {}]
  %s3 = inlined_call_operand.vmem [shape: f32[32,20], index: 3, kind: output, shape index: {}]
  %s4 = sld [smem:[#allocation0]]
  $region22: #{my_network_forward.4} parent=0
    _
  %s6 = ssub.s32 1, %s4
  %s7 = scalar_select 0, %s6, %s4
  // Predicated region
  $region2: #{my_network_forward.4} parent=0 // pred_check
    _
  $region3: #{my_network_forward.4} parent=0 // pred_check_branch
    %9 = sbr.rel (0) target = $region5
  $region4: #{my_network_forward.4} parent=0 // pred_region
    _
  $region5: #{my_network_forward.4} parent=0 // pred_fallthru
    _
  // Predicated region
  $region6: #{my_network_forward.4} parent=0 // pred_check
    _
  $region7: #{my_network_forward.4} parent=0 // pred_check_branch
    %11 = sbr.rel (0) target = $region9
  $region8: #{my_network_forward.4} parent=0 // pred_region
    _
  $region9: #{my_network_forward.4} parent=0 // pred_fallthru
    _
  // Predicated region
  $region10: #{my_network_forward.4} parent=0 // pred_check
    _
  $region11: #{my_network_forward.4} parent=0 // pred_check_branch
    %13 = sbr.rel (0) target = $region13
  $region12: #{my_network_forward.4} parent=0 // pred_region
    _
  $region13: #{my_network_forward.4} parent=0 // pred_fallthru
    _
  %v14 = vld [vmem:[%s1] sm:$0xff]
  %v15 = vld [vmem:[%s1 + $0x8] sm:$0xff]
  %v16 = vld [vmem:[%s1 + $0x10] sm:$0xff]
  %v17 = vld [vmem:[%s1 + $0x18] sm:$0xff]
  %v18 = vld [vmem:[%s1 + $0x20] sm:$0xff]
  %v19 = vld [vmem:[%s1 + $0x28] sm:$0xff]
  %v20 = vld [vmem:[%s1 + $0x30] sm:$0xff]
  %v21 = vld [vmem:[%s1 + $0x38] sm:$0xff]
  %v22 = vld [vmem:[%s1 + $0x40] sm:$0xff]
  %v23 = vld [vmem:[%s1 + $0x48] sm:$0xff]
  %v24 = vld [vmem:[%s1 + $0x50] sm:$0xff]
  %v25 = vld [vmem:[%s1 + $0x58] sm:$0xff]
  %v26 = vld [vmem:[%s1 + $0x60] sm:$0xff]
  %v27 = vld [vmem:[%s1 + $0x68] sm:$0xff]
  %v28 = vld [vmem:[%s1 + $0x70] sm:$0xff]
  %v29 = vld [vmem:[%s1 + $0x78] sm:$0xff]
  %v30 = vld [vmem:[%s1 + $0x80] sm:$0xff]
  %v31 = vld [vmem:[%s1 + $0x88] sm:$0xff]
  %v32 = vld [vmem:[%s1 + $0x90] sm:$0xff]
  %v33 = vld [vmem:[%s1 + $0x98] sm:$0xff]
  %v34 = vld [vmem:[%s1 + $0xa0] sm:$0xff]
  %v35 = vld [vmem:[%s1 + $0xa8] sm:$0xff]
  %v36 = vld [vmem:[%s1 + $0xb0] sm:$0xff]
  %v37 = vld [vmem:[%s1 + $0xb8] sm:$0xff]
  %v38 = vld [vmem:[%s1 + $0xc0] sm:$0xff]
  %v39 = vld [vmem:[%s1 + $0xc8] sm:$0xff]
  %v40 = vld [vmem:[%s1 + $0xd0] sm:$0xff]
  %v41 = vld [vmem:[%s1 + $0xd8] sm:$0xff]
  %v42 = vld [vmem:[%s1 + $0xe0] sm:$0xff]
  %v43 = vld [vmem:[%s1 + $0xe8] sm:$0xff]
  %v44 = vld [vmem:[%s1 + $0xf0] sm:$0xff]
  %v45 = vld [vmem:[%s1 + $0xf8] sm:$0x3]
  %v46 = vld [vmem:[%s0] sm:$0xff]
  %v47 = vld [vmem:[%s0 + $0x8] sm:$0xff]
  %v48 = vld [vmem:[%s0 + $0x10] sm:$0xff]
  %v49 = vld [vmem:[%s0 + $0x18] sm:$0xff]
  %v50 = vld [vmem:[%s0 + $0x20] sm:$0xff]
  %v51 = vld [vmem:[%s0 + $0x28] sm:$0xff]
  %v52 = vld [vmem:[%s0 + $0x30] sm:$0xff]
  %v53 = vld [vmem:[%s0 + $0x38] sm:$0xff]
  %vm54 = vcmask 998400
  %v56 = vsel %vm54, %v47, 0
  %v59 = vsel %vm54, %v49, 0
  %v62 = vsel %vm54, %v51, 0
  %v65 = vsel %vm54, %v53, 0
  %vm67 = vcmask 1041408
  %v69 = vsel %vm67, %v45, 0
  %71 = vmatprep.subr.mxu0 0.0
  %72 = vmatpush1.msra.mxu0 %v14
  %73 = vmatprep.subr.mxu0 0.0
  %74 = vmatpush1.msra.mxu0 %v15
  %75 = vmatprep.subr.mxu0 0.0
  %76 = vmatpush1.msra.mxu0 %v16
  %77 = vmatprep.subr.mxu0 0.0
  %78 = vmatpush1.msra.mxu0 %v17
  %79 = vmatprep.subr.mxu0 0.0
  %80 = vmatpush1.msra.mxu0 %v18
  %81 = vmatprep.subr.mxu0 0.0
  %82 = vmatpush1.msra.mxu0 %v19
  %83 = vmatprep.subr.mxu0 0.0
  %84 = vmatpush1.msra.mxu0 %v20
  %85 = vmatprep.subr.mxu0 0.0
  %86 = vmatpush1.msra.mxu0 %v21
  %87 = vmatprep.subr.mxu0 0.0
  %88 = vmatpush1.msra.mxu0 %v22
  %89 = vmatprep.subr.mxu0 0.0
  %90 = vmatpush1.msra.mxu0 %v23
  %91 = vmatprep.subr.mxu0 0.0
  %92 = vmatpush1.msra.mxu0 %v24
  %93 = vmatprep.subr.mxu0 0.0
  %94 = vmatpush1.msra.mxu0 %v25
  %95 = vmatprep.subr.mxu0 0.0
  %96 = vmatpush1.msra.mxu0 %v26
  %97 = vmatprep.subr.mxu0 0.0
  %98 = vmatpush1.msra.mxu0 %v27
  %99 = vmatprep.subr.mxu0 0.0
  %100 = vmatpush1.msra.mxu0 %v28
  %101 = vmatprep.subr.mxu0 0.0
  %102 = vmatpush1.msra.mxu0 %v29
  %103 = vmatprep.subr.mxu0 0.0
  %104 = vmatpush1.msra.mxu0 %v30
  %105 = vmatprep.subr.mxu0 0.0
  %106 = vmatpush1.msra.mxu0 %v31
  %107 = vmatprep.subr.mxu0 0.0
  %108 = vmatpush1.msra.mxu0 %v32
  %109 = vmatprep.subr.mxu0 0.0
  %110 = vmatpush1.msra.mxu0 %v33
  %111 = vmatprep.subr.mxu0 0.0
  %112 = vmatpush1.msra.mxu0 %v34
  %113 = vmatprep.subr.mxu0 0.0
  %114 = vmatpush1.msra.mxu0 %v35
  %115 = vmatprep.subr.mxu0 0.0
  %116 = vmatpush1.msra.mxu0 %v36
  %117 = vmatprep.subr.mxu0 0.0
  %118 = vmatpush1.msra.mxu0 %v37
  %119 = vmatprep.subr.mxu0 0.0
  %120 = vmatpush1.msra.mxu0 %v38
  %121 = vmatprep.subr.mxu0 0.0
  %122 = vmatpush1.msra.mxu0 %v39
  %123 = vmatprep.subr.mxu0 0.0
  %124 = vmatpush1.msra.mxu0 %v40
  %125 = vmatprep.subr.mxu0 0.0
  %126 = vmatpush1.msra.mxu0 %v41
  %127 = vmatprep.subr.mxu0 0.0
  %128 = vmatpush1.msra.mxu0 %v42
  %129 = vmatprep.subr.mxu0 0.0
  %130 = vmatpush1.msra.mxu0 %v43
  %131 = vmatprep.subr.mxu0 0.0
  %132 = vmatpush1.msra.mxu0 %v44
  %133 = vmatprep.subr.mxu0 0.0
  %134 = vmatpush1.msra.mxu0 %v69
  %135 = vmatprep.mubr.f32.mxu0 %v56
  %136 = vmatmul.mubr.f32.gmra.mrb[0].mxu0 %v46
  %v137 = vpop.f32.mrb[0].mxu0
  %v138 = vadd.f32 0.0, %v137
  %v139 = vpop.f32.mrb[0].mxu0
  %140 = vmatprep.mubr.f32.mxu0 %v59
  %141 = vmatmul.mubr.f32.gmra.mrb[0].mxu0 %v48
  %v142 = vpop.f32.mrb[0].mxu0
  %v143 = vadd.f32 0.0, %v142
  %v144 = vpop.f32.mrb[0].mxu0
  %145 = vmatprep.mubr.f32.mxu0 %v62
  %146 = vmatmul.mubr.f32.gmra.mrb[0].mxu0 %v50
  %v147 = vpop.f32.mrb[0].mxu0
  %v148 = vadd.f32 0.0, %v147
  %v149 = vpop.f32.mrb[0].mxu0
  %150 = vmatprep.mubr.f32.mxu0 %v65
  %151 = vmatmul.mubr.f32.gmra.mrb[0].mxu0 %v52
  %v152 = vpop.f32.mrb[0].mxu0
  %v153 = vadd.f32 0.0, %v152
  %v154 = vpop.f32.mrb[0].mxu0
  %155 = vdwg.mxu0
  %s156 = scalar_lea.vmem %s0, 64
  %v157 = vld [vmem:[%s156] sm:$0xff]
  %v158 = vld [vmem:[%s156 + $0x8] sm:$0xff]
  %v159 = vld [vmem:[%s156 + $0x10] sm:$0xff]
  %v160 = vld [vmem:[%s156 + $0x18] sm:$0xff]
  %v161 = vld [vmem:[%s156 + $0x20] sm:$0xff]
  %v162 = vld [vmem:[%s156 + $0x28] sm:$0xff]
  %v163 = vld [vmem:[%s156 + $0x30] sm:$0xff]
  %v164 = vld [vmem:[%s156 + $0x38] sm:$0xff]
  %v166 = vsel %vm54, %v158, 0
  %v169 = vsel %vm54, %v160, 0
  %v172 = vsel %vm54, %v162, 0
  %v175 = vsel %vm54, %v164, 0
  %177 = vmatprep.subr.mxu0 0.0
  %178 = vmatpush1.msra.mxu0 %v14
  %179 = vmatprep.subr.mxu0 0.0
  %180 = vmatpush1.msra.mxu0 %v15
  %181 = vmatprep.subr.mxu0 0.0
  %182 = vmatpush1.msra.mxu0 %v16
  %183 = vmatprep.subr.mxu0 0.0
  %184 = vmatpush1.msra.mxu0 %v17
  %185 = vmatprep.subr.mxu0 0.0
  %186 = vmatpush1.msra.mxu0 %v18
  %187 = vmatprep.subr.mxu0 0.0
  %188 = vmatpush1.msra.mxu0 %v19
  %189 = vmatprep.subr.mxu0 0.0
  %190 = vmatpush1.msra.mxu0 %v20
  %191 = vmatprep.subr.mxu0 0.0
  %192 = vmatpush1.msra.mxu0 %v21
  %193 = vmatprep.subr.mxu0 0.0
  %194 = vmatpush1.msra.mxu0 %v22
  %195 = vmatprep.subr.mxu0 0.0
  %196 = vmatpush1.msra.mxu0 %v23
  %197 = vmatprep.subr.mxu0 0.0
  %198 = vmatpush1.msra.mxu0 %v24
  %199 = vmatprep.subr.mxu0 0.0
  %200 = vmatpush1.msra.mxu0 %v25
  %201 = vmatprep.subr.mxu0 0.0
  %202 = vmatpush1.msra.mxu0 %v26
  %203 = vmatprep.subr.mxu0 0.0
  %204 = vmatpush1.msra.mxu0 %v27
  %205 = vmatprep.subr.mxu0 0.0
  %206 = vmatpush1.msra.mxu0 %v28
  %207 = vmatprep.subr.mxu0 0.0
  %208 = vmatpush1.msra.mxu0 %v29
  %209 = vmatprep.subr.mxu0 0.0
  %210 = vmatpush1.msra.mxu0 %v30
  %211 = vmatprep.subr.mxu0 0.0
  %212 = vmatpush1.msra.mxu0 %v31
  %213 = vmatprep.subr.mxu0 0.0
  %214 = vmatpush1.msra.mxu0 %v32
  %215 = vmatprep.subr.mxu0 0.0
  %216 = vmatpush1.msra.mxu0 %v33
  %217 = vmatprep.subr.mxu0 0.0
  %218 = vmatpush1.msra.mxu0 %v34
  %219 = vmatprep.subr.mxu0 0.0
  %220 = vmatpush1.msra.mxu0 %v35
  %221 = vmatprep.subr.mxu0 0.0
  %222 = vmatpush1.msra.mxu0 %v36
  %223 = vmatprep.subr.mxu0 0.0
  %224 = vmatpush1.msra.mxu0 %v37
  %225 = vmatprep.subr.mxu0 0.0
  %226 = vmatpush1.msra.mxu0 %v38
  %227 = vmatprep.subr.mxu0 0.0
  %228 = vmatpush1.msra.mxu0 %v39
  %229 = vmatprep.subr.mxu0 0.0
  %230 = vmatpush1.msra.mxu0 %v40
  %231 = vmatprep.subr.mxu0 0.0
  %232 = vmatpush1.msra.mxu0 %v41
  %233 = vmatprep.subr.mxu0 0.0
  %234 = vmatpush1.msra.mxu0 %v42
  %235 = vmatprep.subr.mxu0 0.0
  %236 = vmatpush1.msra.mxu0 %v43
  %237 = vmatprep.subr.mxu0 0.0
  %238 = vmatpush1.msra.mxu0 %v44
  %239 = vmatprep.subr.mxu0 0.0
  %240 = vmatpush1.msra.mxu0 %v69
  %241 = vmatprep.mubr.f32.mxu0 %v166
  %242 = vmatmul.mubr.f32.gmra.mrb[0].mxu0 %v157
  %v243 = vpop.f32.mrb[0].mxu0
  %v244 = vadd.f32 0.0, %v243
  %v245 = vpop.f32.mrb[0].mxu0
  %246 = vmatprep.mubr.f32.mxu0 %v169
  %247 = vmatmul.mubr.f32.gmra.mrb[0].mxu0 %v159
  %v248 = vpop.f32.mrb[0].mxu0
  %v249 = vadd.f32 0.0, %v248
  %v250 = vpop.f32.mrb[0].mxu0
  %251 = vmatprep.mubr.f32.mxu0 %v172
  %252 = vmatmul.mubr.f32.gmra.mrb[0].mxu0 %v161
  %v253 = vpop.f32.mrb[0].mxu0
  %v254 = vadd.f32 0.0, %v253
  %v255 = vpop.f32.mrb[0].mxu0
  %256 = vmatprep.mubr.f32.mxu0 %v175
  %257 = vmatmul.mubr.f32.gmra.mrb[0].mxu0 %v163
  %v258 = vpop.f32.mrb[0].mxu0
  %v259 = vadd.f32 0.0, %v258
  %v260 = vpop.f32.mrb[0].mxu0
  %261 = vdwg.mxu0
  %v262 = vmax.f32 %v138, %v244
  %v263 = vmax.f32 %v143, %v249
  %v264 = vmax.f32 %v148, %v254
  %v265 = vmax.f32 %v153, %v259
  %s266 = scalar_lea.vmem %s0, 128
  %v267 = vld [vmem:[%s266] sm:$0xff]
  %v268 = vld [vmem:[%s266 + $0x8] sm:$0xff]
  %v269 = vld [vmem:[%s266 + $0x10] sm:$0xff]
  %v270 = vld [vmem:[%s266 + $0x18] sm:$0xff]
  %v271 = vld [vmem:[%s266 + $0x20] sm:$0xff]
  %v272 = vld [vmem:[%s266 + $0x28] sm:$0xff]
  %v273 = vld [vmem:[%s266 + $0x30] sm:$0xff]
  %v274 = vld [vmem:[%s266 + $0x38] sm:$0xff]
  %v276 = vsel %vm54, %v268, 0
  %v279 = vsel %vm54, %v270, 0
  %v282 = vsel %vm54, %v272, 0
  %v285 = vsel %vm54, %v274, 0
  %287 = vmatprep.subr.mxu0 0.0
  %288 = vmatpush1.msra.mxu0 %v14
  %289 = vmatprep.subr.mxu0 0.0
  %290 = vmatpush1.msra.mxu0 %v15
  %291 = vmatprep.subr.mxu0 0.0
  %292 = vmatpush1.msra.mxu0 %v16
  %293 = vmatprep.subr.mxu0 0.0
  %294 = vmatpush1.msra.mxu0 %v17
  %295 = vmatprep.subr.mxu0 0.0
  %296 = vmatpush1.msra.mxu0 %v18
  %297 = vmatprep.subr.mxu0 0.0
  %298 = vmatpush1.msra.mxu0 %v19
  %299 = vmatprep.subr.mxu0 0.0
  %300 = vmatpush1.msra.mxu0 %v20
  %301 = vmatprep.subr.mxu0 0.0
  %302 = vmatpush1.msra.mxu0 %v21
  %303 = vmatprep.subr.mxu0 0.0
  %304 = vmatpush1.msra.mxu0 %v22
  %305 = vmatprep.subr.mxu0 0.0
  %306 = vmatpush1.msra.mxu0 %v23
  %307 = vmatprep.subr.mxu0 0.0
  %308 = vmatpush1.msra.mxu0 %v24
  %309 = vmatprep.subr.mxu0 0.0
  %310 = vmatpush1.msra.mxu0 %v25
  %311 = vmatprep.subr.mxu0 0.0
  %312 = vmatpush1.msra.mxu0 %v26
  %313 = vmatprep.subr.mxu0 0.0
  %314 = vmatpush1.msra.mxu0 %v27
  %315 = vmatprep.subr.mxu0 0.0
  %316 = vmatpush1.msra.mxu0 %v28
  %317 = vmatprep.subr.mxu0 0.0
  %318 = vmatpush1.msra.mxu0 %v29
  %319 = vmatprep.subr.mxu0 0.0
  %320 = vmatpush1.msra.mxu0 %v30
  %321 = vmatprep.subr.mxu0 0.0
  %322 = vmatpush1.msra.mxu0 %v31
  %323 = vmatprep.subr.mxu0 0.0
  %324 = vmatpush1.msra.mxu0 %v32
  %325 = vmatprep.subr.mxu0 0.0
  %326 = vmatpush1.msra.mxu0 %v33
  %327 = vmatprep.subr.mxu0 0.0
  %328 = vmatpush1.msra.mxu0 %v34
  %329 = vmatprep.subr.mxu0 0.0
  %330 = vmatpush1.msra.mxu0 %v35
  %331 = vmatprep.subr.mxu0 0.0
  %332 = vmatpush1.msra.mxu0 %v36
  %333 = vmatprep.subr.mxu0 0.0
  %334 = vmatpush1.msra.mxu0 %v37
  %335 = vmatprep.subr.mxu0 0.0
  %336 = vmatpush1.msra.mxu0 %v38
  %337 = vmatprep.subr.mxu0 0.0
  %338 = vmatpush1.msra.mxu0 %v39
  %339 = vmatprep.subr.mxu0 0.0
  %340 = vmatpush1.msra.mxu0 %v40
  %341 = vmatprep.subr.mxu0 0.0
  %342 = vmatpush1.msra.mxu0 %v41
  %343 = vmatprep.subr.mxu0 0.0
  %344 = vmatpush1.msra.mxu0 %v42
  %345 = vmatprep.subr.mxu0 0.0
  %346 = vmatpush1.msra.mxu0 %v43
  %347 = vmatprep.subr.mxu0 0.0
  %348 = vmatpush1.msra.mxu0 %v44
  %349 = vmatprep.subr.mxu0 0.0
  %350 = vmatpush1.msra.mxu0 %v69
  %351 = vmatprep.mubr.f32.mxu0 %v276
  %352 = vmatmul.mubr.f32.gmra.mrb[0].mxu0 %v267
  %v353 = vpop.f32.mrb[0].mxu0
  %v354 = vadd.f32 0.0, %v353
  %v355 = vpop.f32.mrb[0].mxu0
  %356 = vmatprep.mubr.f32.mxu0 %v279
  %357 = vmatmul.mubr.f32.gmra.mrb[0].mxu0 %v269
  %v358 = vpop.f32.mrb[0].mxu0
  %v359 = vadd.f32 0.0, %v358
  %v360 = vpop.f32.mrb[0].mxu0
  %361 = vmatprep.mubr.f32.mxu0 %v282
  %362 = vmatmul.mubr.f32.gmra.mrb[0].mxu0 %v271
  %v363 = vpop.f32.mrb[0].mxu0
  %v364 = vadd.f32 0.0, %v363
  %v365 = vpop.f32.mrb[0].mxu0
  %366 = vmatprep.mubr.f32.mxu0 %v285
  %367 = vmatmul.mubr.f32.gmra.mrb[0].mxu0 %v273
  %v368 = vpop.f32.mrb[0].mxu0
  %v369 = vadd.f32 0.0, %v368
  %v370 = vpop.f32.mrb[0].mxu0
  %371 = vdwg.mxu0
  %v372 = vmax.f32 %v262, %v354
  %v373 = vmax.f32 %v263, %v359
  %v374 = vmax.f32 %v264, %v364
  %v375 = vmax.f32 %v265, %v369
  %s376 = scalar_lea.vmem %s0, 192
  %v377 = vld [vmem:[%s376] sm:$0xff]
  %v378 = vld [vmem:[%s376 + $0x8] sm:$0xff]
  %v379 = vld [vmem:[%s376 + $0x10] sm:$0xff]
  %v380 = vld [vmem:[%s376 + $0x18] sm:$0xff]
  %v381 = vld [vmem:[%s376 + $0x20] sm:$0xff]
  %v382 = vld [vmem:[%s376 + $0x28] sm:$0xff]
  %v383 = vld [vmem:[%s376 + $0x30] sm:$0xff]
  %v384 = vld [vmem:[%s376 + $0x38] sm:$0xff]
  %v386 = vsel %vm54, %v378, 0
  %v389 = vsel %vm54, %v380, 0
  %v392 = vsel %vm54, %v382, 0
  %v395 = vsel %vm54, %v384, 0
  %397 = vmatprep.subr.mxu0 0.0
  %398 = vmatpush1.msra.mxu0 %v14
  %399 = vmatprep.subr.mxu0 0.0
  %400 = vmatpush1.msra.mxu0 %v15
  %401 = vmatprep.subr.mxu0 0.0
  %402 = vmatpush1.msra.mxu0 %v16
  %403 = vmatprep.subr.mxu0 0.0
  %404 = vmatpush1.msra.mxu0 %v17
  %405 = vmatprep.subr.mxu0 0.0
  %406 = vmatpush1.msra.mxu0 %v18
  %407 = vmatprep.subr.mxu0 0.0
  %408 = vmatpush1.msra.mxu0 %v19
  %409 = vmatprep.subr.mxu0 0.0
  %410 = vmatpush1.msra.mxu0 %v20
  %411 = vmatprep.subr.mxu0 0.0
  %412 = vmatpush1.msra.mxu0 %v21
  %413 = vmatprep.subr.mxu0 0.0
  %414 = vmatpush1.msra.mxu0 %v22
  %415 = vmatprep.subr.mxu0 0.0
  %416 = vmatpush1.msra.mxu0 %v23
  %417 = vmatprep.subr.mxu0 0.0
  %418 = vmatpush1.msra.mxu0 %v24
  %419 = vmatprep.subr.mxu0 0.0
  %420 = vmatpush1.msra.mxu0 %v25
  %421 = vmatprep.subr.mxu0 0.0
  %422 = vmatpush1.msra.mxu0 %v26
  %423 = vmatprep.subr.mxu0 0.0
  %424 = vmatpush1.msra.mxu0 %v27
  %425 = vmatprep.subr.mxu0 0.0
  %426 = vmatpush1.msra.mxu0 %v28
  %427 = vmatprep.subr.mxu0 0.0
  %428 = vmatpush1.msra.mxu0 %v29
  %429 = vmatprep.subr.mxu0 0.0
  %430 = vmatpush1.msra.mxu0 %v30
  %431 = vmatprep.subr.mxu0 0.0
  %432 = vmatpush1.msra.mxu0 %v31
  %433 = vmatprep.subr.mxu0 0.0
  %434 = vmatpush1.msra.mxu0 %v32
  %435 = vmatprep.subr.mxu0 0.0
  %436 = vmatpush1.msra.mxu0 %v33
  %437 = vmatprep.subr.mxu0 0.0
  %438 = vmatpush1.msra.mxu0 %v34
  %439 = vmatprep.subr.mxu0 0.0
  %440 = vmatpush1.msra.mxu0 %v35
  %441 = vmatprep.subr.mxu0 0.0
  %442 = vmatpush1.msra.mxu0 %v36
  %443 = vmatprep.subr.mxu0 0.0
  %444 = vmatpush1.msra.mxu0 %v37
  %445 = vmatprep.subr.mxu0 0.0
  %446 = vmatpush1.msra.mxu0 %v38
  %447 = vmatprep.subr.mxu0 0.0
  %448 = vmatpush1.msra.mxu0 %v39
  %449 = vmatprep.subr.mxu0 0.0
  %450 = vmatpush1.msra.mxu0 %v40
  %451 = vmatprep.subr.mxu0 0.0
  %452 = vmatpush1.msra.mxu0 %v41
  %453 = vmatprep.subr.mxu0 0.0
  %454 = vmatpush1.msra.mxu0 %v42
  %455 = vmatprep.subr.mxu0 0.0
  %456 = vmatpush1.msra.mxu0 %v43
  %457 = vmatprep.subr.mxu0 0.0
  %458 = vmatpush1.msra.mxu0 %v44
  %459 = vmatprep.subr.mxu0 0.0
  %460 = vmatpush1.msra.mxu0 %v69
  %461 = vmatprep.mubr.f32.mxu0 %v386
  %462 = vmatmul.mubr.f32.gmra.mrb[0].mxu0 %v377
  %v463 = vpop.f32.mrb[0].mxu0
  %v464 = vadd.f32 0.0, %v463
  %v465 = vpop.f32.mrb[0].mxu0
  %466 = vmatprep.mubr.f32.mxu0 %v389
  %467 = vmatmul.mubr.f32.gmra.mrb[0].mxu0 %v379
  %v468 = vpop.f32.mrb[0].mxu0
  %v469 = vadd.f32 0.0, %v468
  %v470 = vpop.f32.mrb[0].mxu0
  %471 = vmatprep.mubr.f32.mxu0 %v392
  %472 = vmatmul.mubr.f32.gmra.mrb[0].mxu0 %v381
  %v473 = vpop.f32.mrb[0].mxu0
  %v474 = vadd.f32 0.0, %v473
  %v475 = vpop.f32.mrb[0].mxu0
  %476 = vmatprep.mubr.f32.mxu0 %v395
  %477 = vmatmul.mubr.f32.gmra.mrb[0].mxu0 %v383
  %v478 = vpop.f32.mrb[0].mxu0
  %v479 = vadd.f32 0.0, %v478
  %v480 = vpop.f32.mrb[0].mxu0
  %481 = vdwg.mxu0
  %v482 = vmax.f32 %v372, %v464
  %v483 = vmax.f32 %v373, %v469
  %v484 = vmax.f32 %v374, %v474
  %v485 = vmax.f32 %v375, %v479
  %v486 = vld [vmem:[%s2] sm:$0x1]
  %v488 = vlaneseq
  %v489 = vshrl.u32 %v488, 7
  %v490 = vsub.s32 0, %v489
  %v491 = vrot.slane %v486, %v490
  %v493 = vadd.f32 %v482, %v491
  %v494 = vadd.f32 %v483, %v491
  %v495 = vadd.f32 %v484, %v491
  %v496 = vadd.f32 %v485, %v491
  %v497 = vmax.f32 %v493, 0.0
  %v498 = vmax.f32 %v494, 0.0
  %v499 = vmax.f32 %v495, 0.0
  %v500 = vmax.f32 %v496, 0.0
  %vm501 = vcmask 162816
  %502 = vst.msk [vmem:[%s3] sm:$0xff] %vm501, %v497
  %503 = vst.msk [vmem:[%s3 + $0x8] sm:$0xff] %vm501, %v498
  %504 = vst.msk [vmem:[%s3 + $0x10] sm:$0xff] %vm501, %v499
  %505 = vst.msk [vmem:[%s3 + $0x18] sm:$0xff] %vm501, %v500
  // Predicated region
  $region14: #{my_network_forward.4} parent=0 // pred_check
    _
  $region15: #{my_network_forward.4} parent=0 // pred_check_branch
    %507 = sbr.rel (0) target = $region17
  $region16: #{my_network_forward.4} parent=0 // pred_region
    _
  $region17: #{my_network_forward.4} parent=0 // pred_fallthru
    _
  // Predicated region
  $region18: #{my_network_forward.4} parent=0 // pred_check
    _
  $region19: #{my_network_forward.4} parent=0 // pred_check_branch
    %509 = sbr.rel (0) target = $region21
  $region20: #{my_network_forward.4} parent=0 // pred_region
    _
  $region21: #{my_network_forward.4} parent=0 // pred_fallthru
    _

// kernel: my_network_forward.5
$region0: #{my_network_forward.5}
  #allocation0 [shape = 'u32[]', space=smem, size = 0x4, offset = 0x4, fixed_abs, tag = 'smem constant byte address 0x4 - core index']
  #allocation1 [shape = 'u32[144,128]{1,0:T(1,128)}', space=vmem, size = 0x12000, scoped, tag = 'internal scratch']
  %s0 = inlined_call_operand.vmem [shape: f32[8,320], index: 0, kind: input, shape index: {}]
  %s1 = inlined_call_operand.vmem [shape: f32[320,50], index: 1, kind: input, shape index: {}]
  %s2 = inlined_call_operand.vmem [shape: f32[1,50], index: 2, kind: input, shape index: {}]
  %s3 = inlined_call_operand.vmem [shape: f32[50,10], index: 3, kind: input, shape index: {}]
  %s4 = inlined_call_operand.vmem [shape: f32[1,10], index: 4, kind: input, shape index: {}]
  %s5 = inlined_call_operand.vmem [shape: f32[8,10], index: 5, kind: output, shape index: {}]
  %s6 = sld [smem:[#allocation0]]
  $region30: #{my_network_forward.5} parent=0
    _
  %s8 = ssub.s32 1, %s6
  %s9 = scalar_select 0, %s8, %s6
  // Predicated region
  $region2: #{my_network_forward.5} parent=0 // pred_check
    _
  $region3: #{my_network_forward.5} parent=0 // pred_check_branch
    %11 = sbr.rel (0) target = $region5
  $region4: #{my_network_forward.5} parent=0 // pred_region
    _
  $region5: #{my_network_forward.5} parent=0 // pred_fallthru
    _
  // Predicated region
  $region6: #{my_network_forward.5} parent=0 // pred_check
    _
  $region7: #{my_network_forward.5} parent=0 // pred_check_branch
    %13 = sbr.rel (0) target = $region9
  $region8: #{my_network_forward.5} parent=0 // pred_region
    _
  $region9: #{my_network_forward.5} parent=0 // pred_fallthru
    _
  // Predicated region
  $region10: #{my_network_forward.5} parent=0 // pred_check
    _
  $region11: #{my_network_forward.5} parent=0 // pred_check_branch
    %15 = sbr.rel (0) target = $region13
  $region12: #{my_network_forward.5} parent=0 // pred_region
    _
  $region13: #{my_network_forward.5} parent=0 // pred_fallthru
    _
  // Predicated region
  $region14: #{my_network_forward.5} parent=0 // pred_check
    _
  $region15: #{my_network_forward.5} parent=0 // pred_check_branch
    %17 = sbr.rel (0) target = $region17
  $region16: #{my_network_forward.5} parent=0 // pred_region
    _
  $region17: #{my_network_forward.5} parent=0 // pred_fallthru
    _
  // Predicated region
  $region18: #{my_network_forward.5} parent=0 // pred_check
    _
  $region19: #{my_network_forward.5} parent=0 // pred_check_branch
    %19 = sbr.rel (0) target = $region21
  $region20: #{my_network_forward.5} parent=0 // pred_region
    _
  $region21: #{my_network_forward.5} parent=0 // pred_fallthru
    _
  %v20 = vld [vmem:[%s0] sm:$0xff]
  %v21 = vld [vmem:[%s0 + $0x8] sm:$0xff]
  %v22 = vld [vmem:[%s0 + $0x10] sm:$0xff]
  %v23 = vld [vmem:[%s1] sm:$0xff]
  %v24 = vld [vmem:[%s1 + $0x8] sm:$0xff]
  %v25 = vld [vmem:[%s1 + $0x10] sm:$0xff]
  %v26 = vld [vmem:[%s1 + $0x18] sm:$0xff]
  %v27 = vld [vmem:[%s1 + $0x20] sm:$0xff]
  %v28 = vld [vmem:[%s1 + $0x28] sm:$0xff]
  %v29 = vld [vmem:[%s1 + $0x30] sm:$0xff]
  %v30 = vld [vmem:[%s1 + $0x38] sm:$0xff]
  %v31 = vld [vmem:[%s1 + $0x40] sm:$0xff]
  %v32 = vld [vmem:[%s1 + $0x48] sm:$0xff]
  %v33 = vld [vmem:[%s1 + $0x50] sm:$0xff]
  %v34 = vld [vmem:[%s1 + $0x58] sm:$0xff]
  %v35 = vld [vmem:[%s1 + $0x60] sm:$0xff]
  %v36 = vld [vmem:[%s1 + $0x68] sm:$0xff]
  %v37 = vld [vmem:[%s1 + $0x70] sm:$0xff]
  %v38 = vld [vmem:[%s1 + $0x78] sm:$0xff]
  %v39 = vld [vmem:[%s1 + $0x80] sm:$0xff]
  %v40 = vld [vmem:[%s1 + $0x88] sm:$0xff]
  %v41 = vld [vmem:[%s1 + $0x90] sm:$0xff]
  %v42 = vld [vmem:[%s1 + $0x98] sm:$0xff]
  %v43 = vld [vmem:[%s1 + $0xa0] sm:$0xff]
  %v44 = vld [vmem:[%s1 + $0xa8] sm:$0xff]
  %v45 = vld [vmem:[%s1 + $0xb0] sm:$0xff]
  %v46 = vld [vmem:[%s1 + $0xb8] sm:$0xff]
  %v47 = vld [vmem:[%s1 + $0xc0] sm:$0xff]
  %v48 = vld [vmem:[%s1 + $0xc8] sm:$0xff]
  %v49 = vld [vmem:[%s1 + $0xd0] sm:$0xff]
  %v50 = vld [vmem:[%s1 + $0xd8] sm:$0xff]
  %v51 = vld [vmem:[%s1 + $0xe0] sm:$0xff]
  %v52 = vld [vmem:[%s1 + $0xe8] sm:$0xff]
  %v53 = vld [vmem:[%s1 + $0xf0] sm:$0xff]
  %v54 = vld [vmem:[%s1 + $0xf8] sm:$0xff]
  %v55 = vld [vmem:[%s1 + $0x100] sm:$0xff]
  %v56 = vld [vmem:[%s1 + $0x108] sm:$0xff]
  %v57 = vld [vmem:[%s1 + $0x110] sm:$0xff]
  %v58 = vld [vmem:[%s1 + $0x118] sm:$0xff]
  %v59 = vld [vmem:[%s1 + $0x120] sm:$0xff]
  %v60 = vld [vmem:[%s1 + $0x128] sm:$0xff]
  %v61 = vld [vmem:[%s1 + $0x130] sm:$0xff]
  %v62 = vld [vmem:[%s1 + $0x138] sm:$0xff]
  %v63 = vld [vmem:[%s2] sm:$0x1]
  %v65 = vlaneseq
  %v66 = vshrl.u32 %v65, 7
  %v67 = vsub.s32 0, %v66
  %v68 = vrot.slane %v63, %v67
  %vm70 = vcmask 523264
  %v72 = vsel %vm70, %v22, 0
  %74 = vmatprep.subr.mxu0 0.0
  %75 = vmatpush1.msra.mxu0 %v23
  %76 = vmatprep.subr.mxu0 0.0
  %77 = vmatpush1.msra.mxu0 %v24
  %78 = vmatprep.subr.mxu0 0.0
  %79 = vmatpush1.msra.mxu0 %v25
  %80 = vmatprep.subr.mxu0 0.0
  %81 = vmatpush1.msra.mxu0 %v26
  %82 = vmatprep.subr.mxu0 0.0
  %83 = vmatpush1.msra.mxu0 %v27
  %84 = vmatprep.subr.mxu0 0.0
  %85 = vmatpush1.msra.mxu0 %v28
  %86 = vmatprep.subr.mxu0 0.0
  %87 = vmatpush1.msra.mxu0 %v29
  %88 = vmatprep.subr.mxu0 0.0
  %89 = vmatpush1.msra.mxu0 %v30
  %90 = vmatprep.subr.mxu0 0.0
  %91 = vmatpush1.msra.mxu0 %v31
  %92 = vmatprep.subr.mxu0 0.0
  %93 = vmatpush1.msra.mxu0 %v32
  %94 = vmatprep.subr.mxu0 0.0
  %95 = vmatpush1.msra.mxu0 %v33
  %96 = vmatprep.subr.mxu0 0.0
  %97 = vmatpush1.msra.mxu0 %v34
  %98 = vmatprep.subr.mxu0 0.0
  %99 = vmatpush1.msra.mxu0 %v35
  %100 = vmatprep.subr.mxu0 0.0
  %101 = vmatpush1.msra.mxu0 %v36
  %102 = vmatprep.subr.mxu0 0.0
  %103 = vmatpush1.msra.mxu0 %v37
  %104 = vmatprep.subr.mxu0 0.0
  %105 = vmatpush1.msra.mxu0 %v38
  %106 = vmatprep.subr.mxu0 0.0
  %107 = vmatpush1.msra.mxu0 %v39
  %108 = vmatprep.subr.mxu0 0.0
  %109 = vmatpush1.msra.mxu0 %v40
  %110 = vmatprep.subr.mxu0 0.0
  %111 = vmatpush1.msra.mxu0 %v41
  %112 = vmatprep.subr.mxu0 0.0
  %113 = vmatpush1.msra.mxu0 %v42
  %114 = vmatprep.subr.mxu0 0.0
  %115 = vmatpush1.msra.mxu0 %v43
  %116 = vmatprep.subr.mxu0 0.0
  %117 = vmatpush1.msra.mxu0 %v44
  %118 = vmatprep.subr.mxu0 0.0
  %119 = vmatpush1.msra.mxu0 %v45
  %120 = vmatprep.subr.mxu0 0.0
  %121 = vmatpush1.msra.mxu0 %v46
  %122 = vmatprep.subr.mxu0 0.0
  %123 = vmatpush1.msra.mxu0 %v47
  %124 = vmatprep.subr.mxu0 0.0
  %125 = vmatpush1.msra.mxu0 %v48
  %126 = vmatprep.subr.mxu0 0.0
  %127 = vmatpush1.msra.mxu0 %v49
  %128 = vmatprep.subr.mxu0 0.0
  %129 = vmatpush1.msra.mxu0 %v50
  %130 = vmatprep.subr.mxu0 0.0
  %131 = vmatpush1.msra.mxu0 %v51
  %132 = vmatprep.subr.mxu0 0.0
  %133 = vmatpush1.msra.mxu0 %v52
  %134 = vmatprep.subr.mxu0 0.0
  %135 = vmatpush1.msra.mxu0 %v53
  %136 = vmatprep.subr.mxu0 0.0
  %137 = vmatpush1.msra.mxu0 %v54
  %138 = vmatprep.mubr.f32.mxu0 %v21
  %139 = vmatmul.mubr.f32.gmra.mrb[0].mxu0 %v20
  %v140 = vpop.f32.mrb[0].mxu0
  %v141 = vadd.f32 %v68, %v140
  %v142 = vpop.f32.mrb[0].mxu0
  %143 = vdwg.mxu0
  %144 = vmatprep.subr.mxu0 0.0
  %145 = vmatpush1.msra.mxu0 %v55
  %146 = vmatprep.subr.mxu0 0.0
  %147 = vmatpush1.msra.mxu0 %v56
  %148 = vmatprep.subr.mxu0 0.0
  %149 = vmatpush1.msra.mxu0 %v57
  %150 = vmatprep.subr.mxu0 0.0
  %151 = vmatpush1.msra.mxu0 %v58
  %152 = vmatprep.subr.mxu0 0.0
  %153 = vmatpush1.msra.mxu0 %v59
  %154 = vmatprep.subr.mxu0 0.0
  %155 = vmatpush1.msra.mxu0 %v60
  %156 = vmatprep.subr.mxu0 0.0
  %157 = vmatpush1.msra.mxu0 %v61
  %158 = vmatprep.subr.mxu0 0.0
  %159 = vmatpush1.msra.mxu0 %v62
  %160 = vmatprep.subr.mxu0 0.0
  %161 = vmatpush1.msra.mxu0 0.0
  %162 = vmatprep.subr.mxu0 0.0
  %163 = vmatpush1.msra.mxu0 0.0
  %164 = vmatprep.subr.mxu0 0.0
  %165 = vmatpush1.msra.mxu0 0.0
  %166 = vmatprep.subr.mxu0 0.0
  %167 = vmatpush1.msra.mxu0 0.0
  %168 = vmatprep.subr.mxu0 0.0
  %169 = vmatpush1.msra.mxu0 0.0
  %170 = vmatprep.subr.mxu0 0.0
  %171 = vmatpush1.msra.mxu0 0.0
  %172 = vmatprep.subr.mxu0 0.0
  %173 = vmatpush1.msra.mxu0 0.0
  %174 = vmatprep.subr.mxu0 0.0
  %175 = vmatpush1.msra.mxu0 0.0
  %176 = vmatprep.subr.mxu0 0.0
  %177 = vmatpush1.msra.mxu0 0.0
  %178 = vmatprep.subr.mxu0 0.0
  %179 = vmatpush1.msra.mxu0 0.0
  %180 = vmatprep.subr.mxu0 0.0
  %181 = vmatpush1.msra.mxu0 0.0
  %182 = vmatprep.subr.mxu0 0.0
  %183 = vmatpush1.msra.mxu0 0.0
  %184 = vmatprep.subr.mxu0 0.0
  %185 = vmatpush1.msra.mxu0 0.0
  %186 = vmatprep.subr.mxu0 0.0
  %187 = vmatpush1.msra.mxu0 0.0
  %188 = vmatprep.subr.mxu0 0.0
  %189 = vmatpush1.msra.mxu0 0.0
  %190 = vmatprep.subr.mxu0 0.0
  %191 = vmatpush1.msra.mxu0 0.0
  %192 = vmatprep.subr.mxu0 0.0
  %193 = vmatpush1.msra.mxu0 0.0
  %194 = vmatprep.subr.mxu0 0.0
  %195 = vmatpush1.msra.mxu0 0.0
  %196 = vmatprep.subr.mxu0 0.0
  %197 = vmatpush1.msra.mxu0 0.0
  %198 = vmatprep.subr.mxu0 0.0
  %199 = vmatpush1.msra.mxu0 0.0
  %200 = vmatprep.subr.mxu0 0.0
  %201 = vmatpush1.msra.mxu0 0.0
  %202 = vmatprep.subr.mxu0 0.0
  %203 = vmatpush1.msra.mxu0 0.0
  %204 = vmatprep.subr.mxu0 0.0
  %205 = vmatpush1.msra.mxu0 0.0
  %206 = vmatprep.subr.mxu0 0.0
  %207 = vmatpush1.msra.mxu0 0.0
  %208 = vmatprep.mubr.f32.mxu0 0.0
  %209 = vmatmul.mubr.f32.gmra.mrb[0].mxu0 %v72
  %v210 = vpop.f32.mrb[0].mxu0
  %v211 = vadd.f32 %v141, %v210
  %v212 = vpop.f32.mrb[0].mxu0
  %213 = vdwg.mxu0
  %v214 = vmax.f32 %v211, 0.0
  %v215 = vld [vmem:[%s3] sm:$0xff]
  %v216 = vld [vmem:[%s3 + $0x8] sm:$0xff]
  %v217 = vld [vmem:[%s3 + $0x10] sm:$0xff]
  %v218 = vld [vmem:[%s3 + $0x18] sm:$0xff]
  %v219 = vld [vmem:[%s3 + $0x20] sm:$0xff]
  %v220 = vld [vmem:[%s3 + $0x28] sm:$0xff]
  %v221 = vld [vmem:[%s3 + $0x30] sm:$0x3]
  %v222 = vld [vmem:[%s4] sm:$0x1]
  %v224 = vlaneseq
  %v225 = vshrl.u32 %v224, 7
  %v226 = vsub.s32 0, %v225
  %v227 = vrot.slane %v222, %v226
  %vm229 = vcmask 408576
  %v231 = vsel %vm229, %v214, 0
  %vm233 = vcmask 1041408
  %v235 = vsel %vm233, %v221, 0
  %237 = vmatprep.subr.mxu0 0.0
  %238 = vmatpush1.msra.mxu0 %v215
  %239 = vmatprep.subr.mxu0 0.0
  %240 = vmatpush1.msra.mxu0 %v216
  %241 = vmatprep.subr.mxu0 0.0
  %242 = vmatpush1.msra.mxu0 %v217
  %243 = vmatprep.subr.mxu0 0.0
  %244 = vmatpush1.msra.mxu0 %v218
  %245 = vmatprep.subr.mxu0 0.0
  %246 = vmatpush1.msra.mxu0 %v219
  %247 = vmatprep.subr.mxu0 0.0
  %248 = vmatpush1.msra.mxu0 %v220
  %249 = vmatprep.subr.mxu0 0.0
  %250 = vmatpush1.msra.mxu0 %v235
  %251 = vmatprep.subr.mxu0 0.0
  %252 = vmatpush1.msra.mxu0 0.0
  %253 = vmatprep.subr.mxu0 0.0
  %254 = vmatpush1.msra.mxu0 0.0
  %255 = vmatprep.subr.mxu0 0.0
  %256 = vmatpush1.msra.mxu0 0.0
  %257 = vmatprep.subr.mxu0 0.0
  %258 = vmatpush1.msra.mxu0 0.0
  %259 = vmatprep.subr.mxu0 0.0
  %260 = vmatpush1.msra.mxu0 0.0
  %261 = vmatprep.subr.mxu0 0.0
  %262 = vmatpush1.msra.mxu0 0.0
  %263 = vmatprep.subr.mxu0 0.0
  %264 = vmatpush1.msra.mxu0 0.0
  %265 = vmatprep.subr.mxu0 0.0
  %266 = vmatpush1.msra.mxu0 0.0
  %267 = vmatprep.subr.mxu0 0.0
  %268 = vmatpush1.msra.mxu0 0.0
  %269 = vmatprep.subr.mxu0 0.0
  %270 = vmatpush1.msra.mxu0 0.0
  %271 = vmatprep.subr.mxu0 0.0
  %272 = vmatpush1.msra.mxu0 0.0
  %273 = vmatprep.subr.mxu0 0.0
  %274 = vmatpush1.msra.mxu0 0.0
  %275 = vmatprep.subr.mxu0 0.0
  %276 = vmatpush1.msra.mxu0 0.0
  %277 = vmatprep.subr.mxu0 0.0
  %278 = vmatpush1.msra.mxu0 0.0
  %279 = vmatprep.subr.mxu0 0.0
  %280 = vmatpush1.msra.mxu0 0.0
  %281 = vmatprep.subr.mxu0 0.0
  %282 = vmatpush1.msra.mxu0 0.0
  %283 = vmatprep.subr.mxu0 0.0
  %284 = vmatpush1.msra.mxu0 0.0
  %285 = vmatprep.subr.mxu0 0.0
  %286 = vmatpush1.msra.mxu0 0.0
  %287 = vmatprep.subr.mxu0 0.0
  %288 = vmatpush1.msra.mxu0 0.0
  %289 = vmatprep.subr.mxu0 0.0
  %290 = vmatpush1.msra.mxu0 0.0
  %291 = vmatprep.subr.mxu0 0.0
  %292 = vmatpush1.msra.mxu0 0.0
  %293 = vmatprep.subr.mxu0 0.0
  %294 = vmatpush1.msra.mxu0 0.0
  %295 = vmatprep.subr.mxu0 0.0
  %296 = vmatpush1.msra.mxu0 0.0
  %297 = vmatprep.subr.mxu0 0.0
  %298 = vmatpush1.msra.mxu0 0.0
  %299 = vmatprep.subr.mxu0 0.0
  %300 = vmatpush1.msra.mxu0 0.0
  %301 = vmatprep.mubr.f32.mxu0 0.0
  %302 = vmatmul.mubr.f32.gmra.mrb[0].mxu0 %v231
  %v303 = vpop.f32.mrb[0].mxu0
  %v304 = vadd.f32 %v227, %v303
  %v305 = vpop.f32.mrb[0].mxu0
  %306 = vdwg.mxu0
  %vm307 = vcmask 80896
  %v308 = vsel %vm307, %v304, -inf
  %309 = vmax.xlane.f32.xlu0 %v308
  %v310 = vpop.xlane.xlu0 %309
  %v311 = vsub.f32 %v304, %v310
  %v312 = vmul.f32 %v311, 1.442695
  %v313 = vpow.pop %v312
  %v314 = vsel %vm307, %v313, 0.0
  %315 = vadd.xlane.f32.xlu0 %v314
  %v316 = vpop.xlane.xlu0 %315
  %v317 = vlog2.pop %v316
  %v318 = vmul.f32 %v317, 0.6931472
  %v319 = vadd.f32 %v310, %v318
  %v320 = vsub.f32 %v304, %v319
  %321 = vst.msk [vmem:[%s5] sm:$0xff] %vm307, %v320
  // Predicated region
  $region22: #{my_network_forward.5} parent=0 // pred_check
    _
  $region23: #{my_network_forward.5} parent=0 // pred_check_branch
    %323 = sbr.rel (0) target = $region25
  $region24: #{my_network_forward.5} parent=0 // pred_region
    _
  $region25: #{my_network_forward.5} parent=0 // pred_fallthru
    _
  // Predicated region
  $region26: #{my_network_forward.5} parent=0 // pred_check
    _
  $region27: #{my_network_forward.5} parent=0 // pred_check_branch
    %325 = sbr.rel (0) target = $region29
  $region28: #{my_network_forward.5} parent=0 // pred_region
    _
  $region29: #{my_network_forward.5} parent=0 // pred_fallthru
    _

</llo_original>
